<compile_context>
chip_gen: v5e
topology: v5e:2x2
jax: 0.10.0
libtpu: 0.0.40
codegen_flags: <defaults>
</compile_context>

<pallas_src>
import math

import numpy as np
import jax
import jax.numpy as jnp
from jax.experimental import pallas as pl
from jax.experimental.pallas import tpu as pltpu


def conv1x1_fused_kernel(x_ref, w_ref, b_ref, o_ref):
    """One grid step: Bn batches of a (Cout,Cin) @ (Cin,Mpad) MXU matmul.

    x_ref: (Bn, Cin,  Mpad) VMEM f32  -- zero-padded input, spatially flattened
    w_ref: (Cout, Cin)      VMEM f32  -- 1x1 conv weights
    b_ref: (Cout, 1)        VMEM f32  -- bias (+ fused broadcast-scalar `other`)
    o_ref: (Bn, Cout, Mpad) VMEM f32
    """
    bn = x_ref.shape[0]
    w = w_ref[...]            # (Cout, Cin), loaded once per step
    b = b_ref[...]            # (Cout, 1), lane-broadcasts over Mpad
    for n in range(bn):       # static unroll; Bn <= 8
        # One MXU call replaces 24 scalar*vector VPU FMAs; result is lane-dense.
        acc = jnp.dot(w, x_ref[n], preferred_element_type=jnp.float32)
        o_ref[n] = acc + b    # single dense (Cout, Mpad) store per batch


def conv1x1_pad1(x_nchw, weight, bias, other_scalar):
    """Conv2d(Cin, Cout, k=1, stride=1, padding=1) (+ fused scalar add) in Pallas."""
    N, Cin, H, W = x_nchw.shape
    Cout = weight.shape[0]
    Hp, Wp = H + 2, W + 2
    M = Hp * Wp
    Mpad = pl.cdiv(M, 128) * 128          # lane-dense output slab

    # Pad the small Cin-channel input in XLA (cheap at these sizes; see TODO),
    # flatten spatially (no transpose), then pad M up to a multiple of 128.
    xp = jnp.pad(x_nchw.astype(jnp.float32), ((0, 0), (0, 0), (1, 1), (1, 1)))
    xp = xp.reshape(N, Cin, M)
    xp = jnp.pad(xp, ((0, 0), (0, 0), (0, Mpad - M)))

    w = weight.reshape(Cout, Cin).astype(jnp.float32)
    # Fold the broadcast-scalar `other` into the bias once (8 adds in XLA),
    # so the kernel needs no SMEM scalar path at all.
    b_eff = bias.astype(jnp.float32).reshape(Cout, 1) + jnp.asarray(
        other_scalar, jnp.float32
    )

    Bn = math.gcd(N, 8)                   # batches per grid step
    grid = (N // Bn,)

    out_flat = pl.pallas_call(
        conv1x1_fused_kernel,
        out_shape=jax.ShapeDtypeStruct((N, Cout, Mpad), jnp.float32),
        grid=grid,
        in_specs=[
            pl.BlockSpec((Bn, Cin, Mpad), lambda n: (n, 0, 0)),
            pl.BlockSpec((Cout, Cin), lambda n: (0, 0)),   # weights resident in VMEM
            pl.BlockSpec((Cout, 1), lambda n: (0, 0)),     # bias(+other) in VMEM
        ],
        out_specs=pl.BlockSpec((Bn, Cout, Mpad), lambda n: (n, 0, 0)),
        compiler_params=pltpu.CompilerParams(
            dimension_semantics=("parallel",)),
    )(xp, w, b_eff)

    # Drop the lane padding and restore NCHW (both copy-only / free-ish).
    return out_flat[:, :, :M].reshape(N, Cout, Hp, Wp)


def model_forward(x1, other, weight, bias):
    """Mirror of Model.forward:
        v1 = conv(x1)
        if other.shape == v1.shape: other = 0
        return v1 + other
    (shape-equality branch resolved at trace time; shapes are static under jit)
    """
    N, Cin, H, W = x1.shape
    Cout = weight.shape[0]
    v1_shape = (N, Cout, H + 2, W + 2)

    if tuple(np.shape(other)) == v1_shape:
        other = 0

    other_arr = jnp.asarray(other, jnp.float32)
    if other_arr.size == 1:
        # Scalar (or size-1) `other`: fused into the kernel's bias term.
        return conv1x1_pad1(x1, weight, bias, other_arr.reshape(()))
    # General broadcastable `other`: add outside the kernel.
    v1 = conv1x1_pad1(x1, weight, bias, jnp.float32(0.0))
    return v1 + other_arr


def init_conv_params(key, cin=3, cout=8):
    # Deterministic init mimicking torch Conv2d default (uniform +-1/sqrt(fan_in)).
    kw, kb = jax.random.split(key)
    fan_in = cin * 1 * 1
    bound = 1.0 / np.sqrt(fan_in)
    weight = jax.random.uniform(kw, (cout, cin, 1, 1), jnp.float32, -bound, bound)
    bias = jax.random.uniform(kb, (cout,), jnp.float32, -bound, bound)
    return weight, bias


if __name__ == "__main__":
    key = jax.random.PRNGKey(0)
    kx, kp, ko = jax.random.split(key, 3)

    # Small shapes consistent with the module: Cin=3, 64x64 spatial, Cout=8.
    # N=2 exercises the multi-batch-per-grid-step blocking (Bn=2).
    N, Cin, H, W = 2, 3, 64, 64
    Cout = 8
    x1 = jax.random.normal(kx, (N, Cin, H, W), jnp.float32)
    weight, bias = init_conv_params(kp, Cin, Cout)

    # Case 1: `other` matches v1's shape (N, 8, 66, 66) -> treated as 0.
    other_match = jax.random.normal(ko, (N, Cout, H + 2, W + 2), jnp.float32)
    out1 = jax.block_until_ready(model_forward(x1, other_match, weight, bias))

    # Case 2: scalar-like `other` -> fused into the kernel's bias term.
    other_bcast = jnp.full((1, 1, 1, 1), 0.5, jnp.float32)
    out2 = jax.block_until_ready(model_forward(x1, other_bcast, weight, bias))

    # Case 3: broadcastable per-channel `other` -> XLA broadcast-add fallback.
    other_chan = (jnp.arange(Cout, dtype=jnp.float32) * 0.1).reshape(1, Cout, 1, 1)
    out3 = jax.block_until_ready(model_forward(x1, other_chan, weight, bias))

    # Pure-JAX reference (full-precision einsum conv on the zero-padded input).
    xp_ref = jnp.pad(x1, ((0, 0), (0, 0), (1, 1), (1, 1)))
    ref_v1 = (
        jnp.einsum("nchw,oc->nohw", xp_ref, weight.reshape(Cout, Cin),
                   precision=jax.lax.Precision.HIGHEST)
        + bias.reshape(1, Cout, 1, 1)
    )

    assert out1.shape == (N, Cout, H + 2, W + 2)
    np.testing.assert_allclose(np.asarray(out1), np.asarray(ref_v1),
                               atol=1e-5, rtol=1e-5)
    np.testing.assert_allclose(np.asarray(out2), np.asarray(ref_v1 + 0.5),
                               atol=1e-5, rtol=1e-5)
    np.testing.assert_allclose(np.asarray(out3), np.asarray(ref_v1 + other_chan),
                               atol=1e-5, rtol=1e-5)

    print("KERNEL_OK")
</pallas_src>

<mosaic_0001>
module attributes {stable_mosaic.version = 11 : i64} {
  func.func @conv1x1_fused_kernel(%arg0: i32, %arg1: memref<2x3x4480xf32, #tpu.memory_space<vmem>>, %arg2: memref<8x3xf32, #tpu.memory_space<vmem>>, %arg3: memref<8x1xf32, #tpu.memory_space<vmem>>, %arg4: memref<2x8x4480xf32, #tpu.memory_space<vmem>>) attributes {dimension_semantics = [#tpu.dimension_semantics<parallel>], iteration_bounds = array<i64: 1>, scalar_prefetch = 0 : i64, scratch_operands = 0 : i64, tpu.core_type = #tpu.core_type<tc>, window_params = [{transform_indices = @transform_0, window_bounds = array<i64: 2, 3, 4480>}, {pipeline_mode = #tpu.pipeline_mode<synchronous>, transform_indices = @transform_1, window_bounds = array<i64: 8, 3>}, {pipeline_mode = #tpu.pipeline_mode<synchronous>, transform_indices = @transform_2, window_bounds = array<i64: 8, 1>}, {transform_indices = @transform_3, window_bounds = array<i64: 2, 8, 4480>}]} {
    %c0 = arith.constant 0 : index
    %c0_0 = arith.constant 0 : index
    %0 = vector.load %arg2[%c0, %c0_0] : memref<8x3xf32, #tpu.memory_space<vmem>>, vector<8x3xf32>
    %c0_1 = arith.constant 0 : index
    %c0_2 = arith.constant 0 : index
    %1 = vector.load %arg3[%c0_1, %c0_2] : memref<8x1xf32, #tpu.memory_space<vmem>>, vector<8x1xf32>
    %c0_3 = arith.constant 0 : index
    %c0_4 = arith.constant 0 : index
    %c0_5 = arith.constant 0 : index
    %2 = vector.load %arg1[%c0_3, %c0_4, %c0_5] : memref<2x3x4480xf32, #tpu.memory_space<vmem>>, vector<1x3x4480xf32>
    %3 = vector.shape_cast %2 : vector<1x3x4480xf32> to vector<3x4480xf32>
    %cst = arith.constant dense<0.000000e+00> : vector<8x4480xf32>
    %4 = tpu.matmul %0, %3, %cst {dimension_numbers = #tpu.dot_dimension_numbers<[1], [0], [0], [1], [0, 0, 1, 1], [], []>} : vector<8x3xf32>, vector<3x4480xf32>, vector<8x4480xf32> -> vector<8x4480xf32>
    %5 = vector.broadcast %1 : vector<8x1xf32> to vector<8x4480xf32>
    %6 = arith.addf %4, %5 : vector<8x4480xf32>
    %c0_6 = arith.constant 0 : index
    %c0_7 = arith.constant 0 : index
    %c0_8 = arith.constant 0 : index
    %7 = vector.load %arg4[%c0_6, %c0_7, %c0_8] : memref<2x8x4480xf32, #tpu.memory_space<vmem>>, vector<1x8x4480xf32>
    %8 = vector.shape_cast %7 : vector<1x8x4480xf32> to vector<8x4480xf32>
    %9 = vector.shape_cast %6 : vector<8x4480xf32> to vector<1x8x4480xf32>
    tpu.vector_store %arg4[%c0_6, %c0_7, %c0_8], %9 {strides = array<i32>} : memref<2x8x4480xf32, #tpu.memory_space<vmem>>, vector<1x8x4480xf32>,
    %c1 = arith.constant 1 : index
    %c0_9 = arith.constant 0 : index
    %c0_10 = arith.constant 0 : index
    %10 = vector.load %arg1[%c1, %c0_9, %c0_10] : memref<2x3x4480xf32, #tpu.memory_space<vmem>>, vector<1x3x4480xf32>
    %11 = vector.shape_cast %10 : vector<1x3x4480xf32> to vector<3x4480xf32>
    %cst_11 = arith.constant dense<0.000000e+00> : vector<8x4480xf32>
    %12 = tpu.matmul %0, %11, %cst_11 {dimension_numbers = #tpu.dot_dimension_numbers<[1], [0], [0], [1], [0, 0, 1, 1], [], []>} : vector<8x3xf32>, vector<3x4480xf32>, vector<8x4480xf32> -> vector<8x4480xf32>
    %13 = vector.broadcast %1 : vector<8x1xf32> to vector<8x4480xf32>
    %14 = arith.addf %12, %13 : vector<8x4480xf32>
    %c1_12 = arith.constant 1 : index
    %c0_13 = arith.constant 0 : index
    %c0_14 = arith.constant 0 : index
    %15 = vector.load %arg4[%c1_12, %c0_13, %c0_14] : memref<2x8x4480xf32, #tpu.memory_space<vmem>>, vector<1x8x4480xf32>
    %16 = vector.shape_cast %15 : vector<1x8x4480xf32> to vector<8x4480xf32>
    %17 = vector.shape_cast %14 : vector<8x4480xf32> to vector<1x8x4480xf32>
    tpu.vector_store %arg4[%c1_12, %c0_13, %c0_14], %17 {strides = array<i32>} : memref<2x8x4480xf32, #tpu.memory_space<vmem>>, vector<1x8x4480xf32>,
    return
  }
  func.func @transform_0(%arg0: i32) -> (i32, i32, i32) {
    %c0_i32 = arith.constant 0 : i32
    %c0_i32_0 = arith.constant 0 : i32
    %c0_i32_1 = arith.constant 0 : i32
    return %arg0, %c0_i32, %c0_i32_0 : i32, i32, i32
  }
  func.func @transform_1(%arg0: i32) -> (i32, i32) {
    %c0_i32 = arith.constant 0 : i32
    %c0_i32_0 = arith.constant 0 : i32
    %c0_i32_1 = arith.constant 0 : i32
    return %c0_i32, %c0_i32_0 : i32, i32
  }
  func.func @transform_2(%arg0: i32) -> (i32, i32) {
    %c0_i32 = arith.constant 0 : i32
    %c0_i32_0 = arith.constant 0 : i32
    %c0_i32_1 = arith.constant 0 : i32
    return %c0_i32, %c0_i32_0 : i32, i32
  }
  func.func @transform_3(%arg0: i32) -> (i32, i32, i32) {
    %c0_i32 = arith.constant 0 : i32
    %c0_i32_0 = arith.constant 0 : i32
    %c0_i32_1 = arith.constant 0 : i32
    return %arg0, %c0_i32, %c0_i32_0 : i32, i32, i32
  }
}

</mosaic_0001>

<llo_original>
// kernel: tpu_custom_call.1
$region0: #{tpu_custom_call.1}
  #allocation0 [shape = 'u32[]', space=smem, size = 0x4, offset = 0x4, fixed_abs, tag = 'smem constant byte address 0x4 - core index']
  #allocation1 [shape = 'u32[72,128]{1,0:T(1,128)}', space=vmem, size = 0x9000, scoped, tag = 'internal scratch']
  %s0 = inlined_call_operand.vmem [shape: f32[2,3,4480], index: 0, kind: input, shape index: {}]
  %s1 = inlined_call_operand.vmem [shape: f32[8,3], index: 1, kind: input, shape index: {}]
  %s2 = inlined_call_operand.vmem [shape: f32[8,1], index: 2, kind: input, shape index: {}]
  %s3 = inlined_call_operand.hbm [shape: f32[2,8,4480], index: 3, kind: output, shape index: {}]
  %s4 = sld [smem:[#allocation0]]
  $region22: #{tpu_custom_call.1} parent=0
    _
  %s6 = ssub.s32 1, %s4
  %s7 = scalar_select 0, %s6, %s4
  $region1: #{tpu_custom_call.1} parent=0
    #allocation2 [shape = 'u8[286720]{0}', space=vmem, size = 0x46000, scoped, tag = 'output window, operand 0, single buffered']
    #allocation3 [shape = 's32[1]{0}', space=sflag, size = 0x4, scoped, tag = 'scoped memory for tpu_custom_call.1']
    %8 = vsyncpa [#allocation3], 0
    // Predicated region
    $region2: #{tpu_custom_call.1} parent=1 // pred_check
      _
    $region3: #{tpu_custom_call.1} parent=1 // pred_check_branch
      %10 = sbr.rel (0) target = $region5
    $region4: #{tpu_custom_call.1} parent=1 // pred_region
      _
    $region5: #{tpu_custom_call.1} parent=1 // pred_fallthru
      _
    // Predicated region
    $region6: #{tpu_custom_call.1} parent=1 // pred_check
      _
    $region7: #{tpu_custom_call.1} parent=1 // pred_check_branch
      %12 = sbr.rel (0) target = $region9
    $region8: #{tpu_custom_call.1} parent=1 // pred_region
      _
    $region9: #{tpu_custom_call.1} parent=1 // pred_fallthru
      _
    // Predicated region
    $region10: #{tpu_custom_call.1} parent=1 // pred_check
      _
    $region11: #{tpu_custom_call.1} parent=1 // pred_check_branch
      %14 = sbr.rel (0) target = $region13
    $region12: #{tpu_custom_call.1} parent=1 // pred_region
      _
    $region13: #{tpu_custom_call.1} parent=1 // pred_fallthru
      _
    %v15 = vld [vmem:[%s1] sm:$0xff]
    %v16 = vld [vmem:[%s2] sm:$0xff]
    %v17 = vld [vmem:[%s0] sm:$0x77]
    %v18 = vld [vmem:[%s0 + $0x8] sm:$0x77]
    %v19 = vld [vmem:[%s0 + $0x10] sm:$0x77]
    %v20 = vld [vmem:[%s0 + $0x18] sm:$0x77]
    %v21 = vld [vmem:[%s0 + $0x20] sm:$0x77]
    %v22 = vld [vmem:[%s0 + $0x28] sm:$0x77]
    %v23 = vld [vmem:[%s0 + $0x30] sm:$0x77]
    %v24 = vld [vmem:[%s0 + $0x38] sm:$0x77]
    %v25 = vld [vmem:[%s0 + $0x40] sm:$0x77]
    %v26 = vld [vmem:[%s0 + $0x48] sm:$0x77]
    %v27 = vld [vmem:[%s0 + $0x50] sm:$0x77]
    %v28 = vld [vmem:[%s0 + $0x58] sm:$0x77]
    %v29 = vld [vmem:[%s0 + $0x60] sm:$0x77]
    %v30 = vld [vmem:[%s0 + $0x68] sm:$0x77]
    %v31 = vld [vmem:[%s0 + $0x70] sm:$0x77]
    %v32 = vld [vmem:[%s0 + $0x78] sm:$0x77]
    %v33 = vld [vmem:[%s0 + $0x80] sm:$0x77]
    %v34 = vld [vmem:[%s0 + $0x88] sm:$0x7]
    %36 = vset.pattern.permute.xlu0 0
    %37 = vperm.xlu0 %36, %v16
    %v38 = vpop.permute.xlu0 %37
    %58 = vst [vmem:[#allocation1] ss:$2 sm:$0xff] %v17
    %s59 = scalar_lea.vmem [#allocation1], 16
    %60 = vst [vmem:[%s59] ss:$2 sm:$0xff] %v18
    %s61 = scalar_lea.vmem [#allocation1], 32
    %62 = vst [vmem:[%s61] ss:$2 sm:$0xff] %v19
    %s63 = scalar_lea.vmem [#allocation1], 48
    %64 = vst [vmem:[%s63] ss:$2 sm:$0xff] %v20
    %v65 = vld.sshfl [vmem:[#allocation1] sm:$0xff pattern:$0x75316420]
    %v66 = vld.sshfl [vmem:[#allocation1 + $0x8] sm:$0xff pattern:$0x75316420]
    %v67 = vld.sshfl [vmem:[#allocation1 + $0x10] sm:$0xff pattern:$0x75316420]
    %v68 = vld.sshfl [vmem:[#allocation1 + $0x18] sm:$0xff pattern:$0x75316420]
    %v69 = vld.sshfl [vmem:[#allocation1 + $0x20] sm:$0xff pattern:$0x75316420]
    %v70 = vld.sshfl [vmem:[#allocation1 + $0x28] sm:$0xff pattern:$0x75316420]
    %v71 = vld.sshfl [vmem:[#allocation1 + $0x30] sm:$0xff pattern:$0x75316420]
    %v72 = vld.sshfl [vmem:[#allocation1 + $0x38] sm:$0xff pattern:$0x75316420]
    %73 = vst [vmem:[#allocation1] ss:$2 sm:$0xff] %v21
    %74 = vst [vmem:[%s59] ss:$2 sm:$0xff] %v22
    %75 = vst [vmem:[%s61] ss:$2 sm:$0xff] %v23
    %76 = vst [vmem:[%s63] ss:$2 sm:$0xff] %v24
    %v77 = vld.sshfl [vmem:[#allocation1] sm:$0xff pattern:$0x75316420]
    %v78 = vld.sshfl [vmem:[#allocation1 + $0x8] sm:$0xff pattern:$0x75316420]
    %v79 = vld.sshfl [vmem:[#allocation1 + $0x10] sm:$0xff pattern:$0x75316420]
    %v80 = vld.sshfl [vmem:[#allocation1 + $0x18] sm:$0xff pattern:$0x75316420]
    %v81 = vld.sshfl [vmem:[#allocation1 + $0x20] sm:$0xff pattern:$0x75316420]
    %v82 = vld.sshfl [vmem:[#allocation1 + $0x28] sm:$0xff pattern:$0x75316420]
    %v83 = vld.sshfl [vmem:[#allocation1 + $0x30] sm:$0xff pattern:$0x75316420]
    %v84 = vld.sshfl [vmem:[#allocation1 + $0x38] sm:$0xff pattern:$0x75316420]
    %85 = vst [vmem:[#allocation1] ss:$2 sm:$0xff] %v25
    %86 = vst [vmem:[%s59] ss:$2 sm:$0xff] %v26
    %87 = vst [vmem:[%s61] ss:$2 sm:$0xff] %v27
    %88 = vst [vmem:[%s63] ss:$2 sm:$0xff] %v28
    %v89 = vld.sshfl [vmem:[#allocation1] sm:$0xff pattern:$0x75316420]
    %v90 = vld.sshfl [vmem:[#allocation1 + $0x8] sm:$0xff pattern:$0x75316420]
    %v91 = vld.sshfl [vmem:[#allocation1 + $0x10] sm:$0xff pattern:$0x75316420]
    %v92 = vld.sshfl [vmem:[#allocation1 + $0x18] sm:$0xff pattern:$0x75316420]
    %v93 = vld.sshfl [vmem:[#allocation1 + $0x20] sm:$0xff pattern:$0x75316420]
    %v94 = vld.sshfl [vmem:[#allocation1 + $0x28] sm:$0xff pattern:$0x75316420]
    %v95 = vld.sshfl [vmem:[#allocation1 + $0x30] sm:$0xff pattern:$0x75316420]
    %v96 = vld.sshfl [vmem:[#allocation1 + $0x38] sm:$0xff pattern:$0x75316420]
    %97 = vst [vmem:[#allocation1] ss:$2 sm:$0xff] %v29
    %98 = vst [vmem:[%s59] ss:$2 sm:$0xff] %v30
    %99 = vst [vmem:[%s61] ss:$2 sm:$0xff] %v31
    %100 = vst [vmem:[%s63] ss:$2 sm:$0xff] %v32
    %v101 = vld.sshfl [vmem:[#allocation1] sm:$0xff pattern:$0x75316420]
    %v102 = vld.sshfl [vmem:[#allocation1 + $0x8] sm:$0xff pattern:$0x75316420]
    %v103 = vld.sshfl [vmem:[#allocation1 + $0x10] sm:$0xff pattern:$0x75316420]
    %v104 = vld.sshfl [vmem:[#allocation1 + $0x18] sm:$0xff pattern:$0x75316420]
    %v105 = vld.sshfl [vmem:[#allocation1 + $0x20] sm:$0xff pattern:$0x75316420]
    %v106 = vld.sshfl [vmem:[#allocation1 + $0x28] sm:$0xff pattern:$0x75316420]
    %v107 = vld.sshfl [vmem:[#allocation1 + $0x30] sm:$0xff pattern:$0x75316420]
    %v108 = vld.sshfl [vmem:[#allocation1 + $0x38] sm:$0xff pattern:$0x75316420]
    %109 = vst [vmem:[#allocation1] ss:$2 sm:$0xff] %v33
    %110 = vst [vmem:[%s59] ss:$2 sm:$0xff] %v34
    %v111 = vld.sshfl [vmem:[#allocation1] sm:$0xff pattern:$0x75316420]
    %v112 = vld.sshfl [vmem:[#allocation1 + $0x8] sm:$0xff pattern:$0x75316420]
    %v113 = vld.sshfl [vmem:[#allocation1 + $0x10] sm:$0xff pattern:$0x75316420]
    %vm114 = vcmask 23552
    %v116 = vsel %vm114, %v15, 0
    %vm118 = vcmask 1042432
    %v119 = vsel %vm118, %v65, 0
    %v121 = vsel %vm118, %v66, 0
    %v123 = vsel %vm118, %v67, 0
    %v125 = vsel %vm118, %v68, 0
    %v127 = vsel %vm118, %v69, 0
    %v129 = vsel %vm118, %v70, 0
    %v131 = vsel %vm118, %v71, 0
    %v133 = vsel %vm118, %v72, 0
    %v135 = vsel %vm118, %v77, 0
    %v137 = vsel %vm118, %v78, 0
    %v139 = vsel %vm118, %v79, 0
    %v141 = vsel %vm118, %v80, 0
    %v143 = vsel %vm118, %v81, 0
    %v145 = vsel %vm118, %v82, 0
    %v147 = vsel %vm118, %v83, 0
    %v149 = vsel %vm118, %v84, 0
    %v151 = vsel %vm118, %v89, 0
    %v153 = vsel %vm118, %v90, 0
    %v155 = vsel %vm118, %v91, 0
    %v157 = vsel %vm118, %v92, 0
    %v159 = vsel %vm118, %v93, 0
    %v161 = vsel %vm118, %v94, 0
    %v163 = vsel %vm118, %v95, 0
    %v165 = vsel %vm118, %v96, 0
    %v167 = vsel %vm118, %v101, 0
    %v169 = vsel %vm118, %v102, 0
    %v171 = vsel %vm118, %v103, 0
    %v173 = vsel %vm118, %v104, 0
    %v175 = vsel %vm118, %v105, 0
    %v177 = vsel %vm118, %v106, 0
    %v179 = vsel %vm118, %v107, 0
    %v181 = vsel %vm118, %v108, 0
    %v183 = vsel %vm118, %v111, 0
    %v185 = vsel %vm118, %v112, 0
    %v187 = vsel %vm118, %v113, 0
    %189 = vmatpush.msra.mxu0 0.0
    %190 = vmatpush.msra.mxu0 0.0
    %191 = vmatpush.msra.mxu0 0.0
    %192 = vmatpush.msra.mxu0 0.0
    %193 = vmatpush.msra.mxu0 0.0
    %194 = vmatpush.msra.mxu0 0.0
    %195 = vmatpush.msra.mxu0 0.0
    %196 = vmatpush.msra.mxu0 0.0
    %197 = vmatpush.msra.mxu0 0.0
    %198 = vmatpush.msra.mxu0 0.0
    %199 = vmatpush.msra.mxu0 0.0
    %200 = vmatpush.msra.mxu0 0.0
    %201 = vmatpush.msra.mxu0 0.0
    %202 = vmatpush.msra.mxu0 0.0
    %203 = vmatpush.msra.mxu0 0.0
    %204 = vmatpush.msra.mxu0 %v119
    %205 = vmatmul.f32.gmra.mxu0 %v116
    %v206 = vpop.f32.mrf.mxu0
    %v207 = vadd.f32 %v38, %v206
    %208 = vdwg.mxu0
    %209 = vmatpush.msra.mxu0 0.0
    %210 = vmatpush.msra.mxu0 0.0
    %211 = vmatpush.msra.mxu0 0.0
    %212 = vmatpush.msra.mxu0 0.0
    %213 = vmatpush.msra.mxu0 0.0
    %214 = vmatpush.msra.mxu0 0.0
    %215 = vmatpush.msra.mxu0 0.0
    %216 = vmatpush.msra.mxu0 0.0
    %217 = vmatpush.msra.mxu0 0.0
    %218 = vmatpush.msra.mxu0 0.0
    %219 = vmatpush.msra.mxu0 0.0
    %220 = vmatpush.msra.mxu0 0.0
    %221 = vmatpush.msra.mxu0 0.0
    %222 = vmatpush.msra.mxu0 0.0
    %223 = vmatpush.msra.mxu0 0.0
    %224 = vmatpush.msra.mxu0 %v121
    %225 = vmatmul.f32.gmra.mxu0 %v116
    %v226 = vpop.f32.mrf.mxu0
    %v227 = vadd.f32 %v38, %v226
    %228 = vdwg.mxu0
    %229 = vmatpush.msra.mxu0 0.0
    %230 = vmatpush.msra.mxu0 0.0
    %231 = vmatpush.msra.mxu0 0.0
    %232 = vmatpush.msra.mxu0 0.0
    %233 = vmatpush.msra.mxu0 0.0
    %234 = vmatpush.msra.mxu0 0.0
    %235 = vmatpush.msra.mxu0 0.0
    %236 = vmatpush.msra.mxu0 0.0
    %237 = vmatpush.msra.mxu0 0.0
    %238 = vmatpush.msra.mxu0 0.0
    %239 = vmatpush.msra.mxu0 0.0
    %240 = vmatpush.msra.mxu0 0.0
    %241 = vmatpush.msra.mxu0 0.0
    %242 = vmatpush.msra.mxu0 0.0
    %243 = vmatpush.msra.mxu0 0.0
    %244 = vmatpush.msra.mxu0 %v123
    %245 = vmatmul.f32.gmra.mxu0 %v116
    %v246 = vpop.f32.mrf.mxu0
    %v247 = vadd.f32 %v38, %v246
    %248 = vdwg.mxu0
    %249 = vmatpush.msra.mxu0 0.0
    %250 = vmatpush.msra.mxu0 0.0
    %251 = vmatpush.msra.mxu0 0.0
    %252 = vmatpush.msra.mxu0 0.0
    %253 = vmatpush.msra.mxu0 0.0
    %254 = vmatpush.msra.mxu0 0.0
    %255 = vmatpush.msra.mxu0 0.0
    %256 = vmatpush.msra.mxu0 0.0
    %257 = vmatpush.msra.mxu0 0.0
    %258 = vmatpush.msra.mxu0 0.0
    %259 = vmatpush.msra.mxu0 0.0
    %260 = vmatpush.msra.mxu0 0.0
    %261 = vmatpush.msra.mxu0 0.0
    %262 = vmatpush.msra.mxu0 0.0
    %263 = vmatpush.msra.mxu0 0.0
    %264 = vmatpush.msra.mxu0 %v125
    %265 = vmatmul.f32.gmra.mxu0 %v116
    %v266 = vpop.f32.mrf.mxu0
    %v267 = vadd.f32 %v38, %v266
    %268 = vdwg.mxu0
    %269 = vmatpush.msra.mxu0 0.0
    %270 = vmatpush.msra.mxu0 0.0
    %271 = vmatpush.msra.mxu0 0.0
    %272 = vmatpush.msra.mxu0 0.0
    %273 = vmatpush.msra.mxu0 0.0
    %274 = vmatpush.msra.mxu0 0.0
    %275 = vmatpush.msra.mxu0 0.0
    %276 = vmatpush.msra.mxu0 0.0
    %277 = vmatpush.msra.mxu0 0.0
    %278 = vmatpush.msra.mxu0 0.0
    %279 = vmatpush.msra.mxu0 0.0
    %280 = vmatpush.msra.mxu0 0.0
    %281 = vmatpush.msra.mxu0 0.0
    %282 = vmatpush.msra.mxu0 0.0
    %283 = vmatpush.msra.mxu0 0.0
    %284 = vmatpush.msra.mxu0 %v127
    %285 = vmatmul.f32.gmra.mxu0 %v116
    %v286 = vpop.f32.mrf.mxu0
    %v287 = vadd.f32 %v38, %v286
    %288 = vdwg.mxu0
    %289 = vmatpush.msra.mxu0 0.0
    %290 = vmatpush.msra.mxu0 0.0
    %291 = vmatpush.msra.mxu0 0.0
    %292 = vmatpush.msra.mxu0 0.0
    %293 = vmatpush.msra.mxu0 0.0
    %294 = vmatpush.msra.mxu0 0.0
    %295 = vmatpush.msra.mxu0 0.0
    %296 = vmatpush.msra.mxu0 0.0
    %297 = vmatpush.msra.mxu0 0.0
    %298 = vmatpush.msra.mxu0 0.0
    %299 = vmatpush.msra.mxu0 0.0
    %300 = vmatpush.msra.mxu0 0.0
    %301 = vmatpush.msra.mxu0 0.0
    %302 = vmatpush.msra.mxu0 0.0
    %303 = vmatpush.msra.mxu0 0.0
    %304 = vmatpush.msra.mxu0 %v129
    %305 = vmatmul.f32.gmra.mxu0 %v116
    %v306 = vpop.f32.mrf.mxu0
    %v307 = vadd.f32 %v38, %v306
    %308 = vdwg.mxu0
    %309 = vmatpush.msra.mxu0 0.0
    %310 = vmatpush.msra.mxu0 0.0
    %311 = vmatpush.msra.mxu0 0.0
    %312 = vmatpush.msra.mxu0 0.0
    %313 = vmatpush.msra.mxu0 0.0
    %314 = vmatpush.msra.mxu0 0.0
    %315 = vmatpush.msra.mxu0 0.0
    %316 = vmatpush.msra.mxu0 0.0
    %317 = vmatpush.msra.mxu0 0.0
    %318 = vmatpush.msra.mxu0 0.0
    %319 = vmatpush.msra.mxu0 0.0
    %320 = vmatpush.msra.mxu0 0.0
    %321 = vmatpush.msra.mxu0 0.0
    %322 = vmatpush.msra.mxu0 0.0
    %323 = vmatpush.msra.mxu0 0.0
    %324 = vmatpush.msra.mxu0 %v131
    %325 = vmatmul.f32.gmra.mxu0 %v116
    %v326 = vpop.f32.mrf.mxu0
    %v327 = vadd.f32 %v38, %v326
    %328 = vdwg.mxu0
    %329 = vmatpush.msra.mxu0 0.0
    %330 = vmatpush.msra.mxu0 0.0
    %331 = vmatpush.msra.mxu0 0.0
    %332 = vmatpush.msra.mxu0 0.0
    %333 = vmatpush.msra.mxu0 0.0
    %334 = vmatpush.msra.mxu0 0.0
    %335 = vmatpush.msra.mxu0 0.0
    %336 = vmatpush.msra.mxu0 0.0
    %337 = vmatpush.msra.mxu0 0.0
    %338 = vmatpush.msra.mxu0 0.0
    %339 = vmatpush.msra.mxu0 0.0
    %340 = vmatpush.msra.mxu0 0.0
    %341 = vmatpush.msra.mxu0 0.0
    %342 = vmatpush.msra.mxu0 0.0
    %343 = vmatpush.msra.mxu0 0.0
    %344 = vmatpush.msra.mxu0 %v133
    %345 = vmatmul.f32.gmra.mxu0 %v116
    %v346 = vpop.f32.mrf.mxu0
    %v347 = vadd.f32 %v38, %v346
    %348 = vdwg.mxu0
    %349 = vmatpush.msra.mxu0 0.0
    %350 = vmatpush.msra.mxu0 0.0
    %351 = vmatpush.msra.mxu0 0.0
    %352 = vmatpush.msra.mxu0 0.0
    %353 = vmatpush.msra.mxu0 0.0
    %354 = vmatpush.msra.mxu0 0.0
    %355 = vmatpush.msra.mxu0 0.0
    %356 = vmatpush.msra.mxu0 0.0
    %357 = vmatpush.msra.mxu0 0.0
    %358 = vmatpush.msra.mxu0 0.0
    %359 = vmatpush.msra.mxu0 0.0
    %360 = vmatpush.msra.mxu0 0.0
    %361 = vmatpush.msra.mxu0 0.0
    %362 = vmatpush.msra.mxu0 0.0
    %363 = vmatpush.msra.mxu0 0.0
    %364 = vmatpush.msra.mxu0 %v135
    %365 = vmatmul.f32.gmra.mxu0 %v116
    %v366 = vpop.f32.mrf.mxu0
    %v367 = vadd.f32 %v38, %v366
    %368 = vdwg.mxu0
    %369 = vmatpush.msra.mxu0 0.0
    %370 = vmatpush.msra.mxu0 0.0
    %371 = vmatpush.msra.mxu0 0.0
    %372 = vmatpush.msra.mxu0 0.0
    %373 = vmatpush.msra.mxu0 0.0
    %374 = vmatpush.msra.mxu0 0.0
    %375 = vmatpush.msra.mxu0 0.0
    %376 = vmatpush.msra.mxu0 0.0
    %377 = vmatpush.msra.mxu0 0.0
    %378 = vmatpush.msra.mxu0 0.0
    %379 = vmatpush.msra.mxu0 0.0
    %380 = vmatpush.msra.mxu0 0.0
    %381 = vmatpush.msra.mxu0 0.0
    %382 = vmatpush.msra.mxu0 0.0
    %383 = vmatpush.msra.mxu0 0.0
    %384 = vmatpush.msra.mxu0 %v137
    %385 = vmatmul.f32.gmra.mxu0 %v116
    %v386 = vpop.f32.mrf.mxu0
    %v387 = vadd.f32 %v38, %v386
    %388 = vdwg.mxu0
    %389 = vmatpush.msra.mxu0 0.0
    %390 = vmatpush.msra.mxu0 0.0
    %391 = vmatpush.msra.mxu0 0.0
    %392 = vmatpush.msra.mxu0 0.0
    %393 = vmatpush.msra.mxu0 0.0
    %394 = vmatpush.msra.mxu0 0.0
    %395 = vmatpush.msra.mxu0 0.0
    %396 = vmatpush.msra.mxu0 0.0
    %397 = vmatpush.msra.mxu0 0.0
    %398 = vmatpush.msra.mxu0 0.0
    %399 = vmatpush.msra.mxu0 0.0
    %400 = vmatpush.msra.mxu0 0.0
    %401 = vmatpush.msra.mxu0 0.0
    %402 = vmatpush.msra.mxu0 0.0
    %403 = vmatpush.msra.mxu0 0.0
    %404 = vmatpush.msra.mxu0 %v139
    %405 = vmatmul.f32.gmra.mxu0 %v116
    %v406 = vpop.f32.mrf.mxu0
    %v407 = vadd.f32 %v38, %v406
    %408 = vdwg.mxu0
    %409 = vmatpush.msra.mxu0 0.0
    %410 = vmatpush.msra.mxu0 0.0
    %411 = vmatpush.msra.mxu0 0.0
    %412 = vmatpush.msra.mxu0 0.0
    %413 = vmatpush.msra.mxu0 0.0
    %414 = vmatpush.msra.mxu0 0.0
    %415 = vmatpush.msra.mxu0 0.0
    %416 = vmatpush.msra.mxu0 0.0
    %417 = vmatpush.msra.mxu0 0.0
    %418 = vmatpush.msra.mxu0 0.0
    %419 = vmatpush.msra.mxu0 0.0
    %420 = vmatpush.msra.mxu0 0.0
    %421 = vmatpush.msra.mxu0 0.0
    %422 = vmatpush.msra.mxu0 0.0
    %423 = vmatpush.msra.mxu0 0.0
    %424 = vmatpush.msra.mxu0 %v141
    %425 = vmatmul.f32.gmra.mxu0 %v116
    %v426 = vpop.f32.mrf.mxu0
    %v427 = vadd.f32 %v38, %v426
    %428 = vdwg.mxu0
    %429 = vmatpush.msra.mxu0 0.0
    %430 = vmatpush.msra.mxu0 0.0
    %431 = vmatpush.msra.mxu0 0.0
    %432 = vmatpush.msra.mxu0 0.0
    %433 = vmatpush.msra.mxu0 0.0
    %434 = vmatpush.msra.mxu0 0.0
    %435 = vmatpush.msra.mxu0 0.0
    %436 = vmatpush.msra.mxu0 0.0
    %437 = vmatpush.msra.mxu0 0.0
    %438 = vmatpush.msra.mxu0 0.0
    %439 = vmatpush.msra.mxu0 0.0
    %440 = vmatpush.msra.mxu0 0.0
    %441 = vmatpush.msra.mxu0 0.0
    %442 = vmatpush.msra.mxu0 0.0
    %443 = vmatpush.msra.mxu0 0.0
    %444 = vmatpush.msra.mxu0 %v143
    %445 = vmatmul.f32.gmra.mxu0 %v116
    %v446 = vpop.f32.mrf.mxu0
    %v447 = vadd.f32 %v38, %v446
    %448 = vdwg.mxu0
    %449 = vmatpush.msra.mxu0 0.0
    %450 = vmatpush.msra.mxu0 0.0
    %451 = vmatpush.msra.mxu0 0.0
    %452 = vmatpush.msra.mxu0 0.0
    %453 = vmatpush.msra.mxu0 0.0
    %454 = vmatpush.msra.mxu0 0.0
    %455 = vmatpush.msra.mxu0 0.0
    %456 = vmatpush.msra.mxu0 0.0
    %457 = vmatpush.msra.mxu0 0.0
    %458 = vmatpush.msra.mxu0 0.0
    %459 = vmatpush.msra.mxu0 0.0
    %460 = vmatpush.msra.mxu0 0.0
    %461 = vmatpush.msra.mxu0 0.0
    %462 = vmatpush.msra.mxu0 0.0
    %463 = vmatpush.msra.mxu0 0.0
    %464 = vmatpush.msra.mxu0 %v145
    %465 = vmatmul.f32.gmra.mxu0 %v116
    %v466 = vpop.f32.mrf.mxu0
    %v467 = vadd.f32 %v38, %v466
    %468 = vdwg.mxu0
    %469 = vmatpush.msra.mxu0 0.0
    %470 = vmatpush.msra.mxu0 0.0
    %471 = vmatpush.msra.mxu0 0.0
    %472 = vmatpush.msra.mxu0 0.0
    %473 = vmatpush.msra.mxu0 0.0
    %474 = vmatpush.msra.mxu0 0.0
    %475 = vmatpush.msra.mxu0 0.0
    %476 = vmatpush.msra.mxu0 0.0
    %477 = vmatpush.msra.mxu0 0.0
    %478 = vmatpush.msra.mxu0 0.0
    %479 = vmatpush.msra.mxu0 0.0
    %480 = vmatpush.msra.mxu0 0.0
    %481 = vmatpush.msra.mxu0 0.0
    %482 = vmatpush.msra.mxu0 0.0
    %483 = vmatpush.msra.mxu0 0.0
    %484 = vmatpush.msra.mxu0 %v147
    %485 = vmatmul.f32.gmra.mxu0 %v116
    %v486 = vpop.f32.mrf.mxu0
    %v487 = vadd.f32 %v38, %v486
    %488 = vdwg.mxu0
    %489 = vmatpush.msra.mxu0 0.0
    %490 = vmatpush.msra.mxu0 0.0
    %491 = vmatpush.msra.mxu0 0.0
    %492 = vmatpush.msra.mxu0 0.0
    %493 = vmatpush.msra.mxu0 0.0
    %494 = vmatpush.msra.mxu0 0.0
    %495 = vmatpush.msra.mxu0 0.0
    %496 = vmatpush.msra.mxu0 0.0
    %497 = vmatpush.msra.mxu0 0.0
    %498 = vmatpush.msra.mxu0 0.0
    %499 = vmatpush.msra.mxu0 0.0
    %500 = vmatpush.msra.mxu0 0.0
    %501 = vmatpush.msra.mxu0 0.0
    %502 = vmatpush.msra.mxu0 0.0
    %503 = vmatpush.msra.mxu0 0.0
    %504 = vmatpush.msra.mxu0 %v149
    %505 = vmatmul.f32.gmra.mxu0 %v116
    %v506 = vpop.f32.mrf.mxu0
    %v507 = vadd.f32 %v38, %v506
    %508 = vdwg.mxu0
    %509 = vmatpush.msra.mxu0 0.0
    %510 = vmatpush.msra.mxu0 0.0
    %511 = vmatpush.msra.mxu0 0.0
    %512 = vmatpush.msra.mxu0 0.0
    %513 = vmatpush.msra.mxu0 0.0
    %514 = vmatpush.msra.mxu0 0.0
    %515 = vmatpush.msra.mxu0 0.0
    %516 = vmatpush.msra.mxu0 0.0
    %517 = vmatpush.msra.mxu0 0.0
    %518 = vmatpush.msra.mxu0 0.0
    %519 = vmatpush.msra.mxu0 0.0
    %520 = vmatpush.msra.mxu0 0.0
    %521 = vmatpush.msra.mxu0 0.0
    %522 = vmatpush.msra.mxu0 0.0
    %523 = vmatpush.msra.mxu0 0.0
    %524 = vmatpush.msra.mxu0 %v151
    %525 = vmatmul.f32.gmra.mxu0 %v116
    %v526 = vpop.f32.mrf.mxu0
    %v527 = vadd.f32 %v38, %v526
    %528 = vdwg.mxu0
    %529 = vmatpush.msra.mxu0 0.0
    %530 = vmatpush.msra.mxu0 0.0
    %531 = vmatpush.msra.mxu0 0.0
    %532 = vmatpush.msra.mxu0 0.0
    %533 = vmatpush.msra.mxu0 0.0
    %534 = vmatpush.msra.mxu0 0.0
    %535 = vmatpush.msra.mxu0 0.0
    %536 = vmatpush.msra.mxu0 0.0
    %537 = vmatpush.msra.mxu0 0.0
    %538 = vmatpush.msra.mxu0 0.0
    %539 = vmatpush.msra.mxu0 0.0
    %540 = vmatpush.msra.mxu0 0.0
    %541 = vmatpush.msra.mxu0 0.0
    %542 = vmatpush.msra.mxu0 0.0
    %543 = vmatpush.msra.mxu0 0.0
    %544 = vmatpush.msra.mxu0 %v153
    %545 = vmatmul.f32.gmra.mxu0 %v116
    %v546 = vpop.f32.mrf.mxu0
    %v547 = vadd.f32 %v38, %v546
    %548 = vdwg.mxu0
    %549 = vmatpush.msra.mxu0 0.0
    %550 = vmatpush.msra.mxu0 0.0
    %551 = vmatpush.msra.mxu0 0.0
    %552 = vmatpush.msra.mxu0 0.0
    %553 = vmatpush.msra.mxu0 0.0
    %554 = vmatpush.msra.mxu0 0.0
    %555 = vmatpush.msra.mxu0 0.0
    %556 = vmatpush.msra.mxu0 0.0
    %557 = vmatpush.msra.mxu0 0.0
    %558 = vmatpush.msra.mxu0 0.0
    %559 = vmatpush.msra.mxu0 0.0
    %560 = vmatpush.msra.mxu0 0.0
    %561 = vmatpush.msra.mxu0 0.0
    %562 = vmatpush.msra.mxu0 0.0
    %563 = vmatpush.msra.mxu0 0.0
    %564 = vmatpush.msra.mxu0 %v155
    %565 = vmatmul.f32.gmra.mxu0 %v116
    %v566 = vpop.f32.mrf.mxu0
    %v567 = vadd.f32 %v38, %v566
    %568 = vdwg.mxu0
    %569 = vmatpush.msra.mxu0 0.0
    %570 = vmatpush.msra.mxu0 0.0
    %571 = vmatpush.msra.mxu0 0.0
    %572 = vmatpush.msra.mxu0 0.0
    %573 = vmatpush.msra.mxu0 0.0
    %574 = vmatpush.msra.mxu0 0.0
    %575 = vmatpush.msra.mxu0 0.0
    %576 = vmatpush.msra.mxu0 0.0
    %577 = vmatpush.msra.mxu0 0.0
    %578 = vmatpush.msra.mxu0 0.0
    %579 = vmatpush.msra.mxu0 0.0
    %580 = vmatpush.msra.mxu0 0.0
    %581 = vmatpush.msra.mxu0 0.0
    %582 = vmatpush.msra.mxu0 0.0
    %583 = vmatpush.msra.mxu0 0.0
    %584 = vmatpush.msra.mxu0 %v157
    %585 = vmatmul.f32.gmra.mxu0 %v116
    %v586 = vpop.f32.mrf.mxu0
    %v587 = vadd.f32 %v38, %v586
    %588 = vdwg.mxu0
    %589 = vmatpush.msra.mxu0 0.0
    %590 = vmatpush.msra.mxu0 0.0
    %591 = vmatpush.msra.mxu0 0.0
    %592 = vmatpush.msra.mxu0 0.0
    %593 = vmatpush.msra.mxu0 0.0
    %594 = vmatpush.msra.mxu0 0.0
    %595 = vmatpush.msra.mxu0 0.0
    %596 = vmatpush.msra.mxu0 0.0
    %597 = vmatpush.msra.mxu0 0.0
    %598 = vmatpush.msra.mxu0 0.0
    %599 = vmatpush.msra.mxu0 0.0
    %600 = vmatpush.msra.mxu0 0.0
    %601 = vmatpush.msra.mxu0 0.0
    %602 = vmatpush.msra.mxu0 0.0
    %603 = vmatpush.msra.mxu0 0.0
    %604 = vmatpush.msra.mxu0 %v159
    %605 = vmatmul.f32.gmra.mxu0 %v116
    %v606 = vpop.f32.mrf.mxu0
    %v607 = vadd.f32 %v38, %v606
    %608 = vdwg.mxu0
    %609 = vmatpush.msra.mxu0 0.0
    %610 = vmatpush.msra.mxu0 0.0
    %611 = vmatpush.msra.mxu0 0.0
    %612 = vmatpush.msra.mxu0 0.0
    %613 = vmatpush.msra.mxu0 0.0
    %614 = vmatpush.msra.mxu0 0.0
    %615 = vmatpush.msra.mxu0 0.0
    %616 = vmatpush.msra.mxu0 0.0
    %617 = vmatpush.msra.mxu0 0.0
    %618 = vmatpush.msra.mxu0 0.0
    %619 = vmatpush.msra.mxu0 0.0
    %620 = vmatpush.msra.mxu0 0.0
    %621 = vmatpush.msra.mxu0 0.0
    %622 = vmatpush.msra.mxu0 0.0
    %623 = vmatpush.msra.mxu0 0.0
    %624 = vmatpush.msra.mxu0 %v161
    %625 = vmatmul.f32.gmra.mxu0 %v116
    %v626 = vpop.f32.mrf.mxu0
    %v627 = vadd.f32 %v38, %v626
    %628 = vdwg.mxu0
    %629 = vmatpush.msra.mxu0 0.0
    %630 = vmatpush.msra.mxu0 0.0
    %631 = vmatpush.msra.mxu0 0.0
    %632 = vmatpush.msra.mxu0 0.0
    %633 = vmatpush.msra.mxu0 0.0
    %634 = vmatpush.msra.mxu0 0.0
    %635 = vmatpush.msra.mxu0 0.0
    %636 = vmatpush.msra.mxu0 0.0
    %637 = vmatpush.msra.mxu0 0.0
    %638 = vmatpush.msra.mxu0 0.0
    %639 = vmatpush.msra.mxu0 0.0
    %640 = vmatpush.msra.mxu0 0.0
    %641 = vmatpush.msra.mxu0 0.0
    %642 = vmatpush.msra.mxu0 0.0
    %643 = vmatpush.msra.mxu0 0.0
    %644 = vmatpush.msra.mxu0 %v163
    %645 = vmatmul.f32.gmra.mxu0 %v116
    %v646 = vpop.f32.mrf.mxu0
    %v647 = vadd.f32 %v38, %v646
    %648 = vdwg.mxu0
    %649 = vmatpush.msra.mxu0 0.0
    %650 = vmatpush.msra.mxu0 0.0
    %651 = vmatpush.msra.mxu0 0.0
    %652 = vmatpush.msra.mxu0 0.0
    %653 = vmatpush.msra.mxu0 0.0
    %654 = vmatpush.msra.mxu0 0.0
    %655 = vmatpush.msra.mxu0 0.0
    %656 = vmatpush.msra.mxu0 0.0
    %657 = vmatpush.msra.mxu0 0.0
    %658 = vmatpush.msra.mxu0 0.0
    %659 = vmatpush.msra.mxu0 0.0
    %660 = vmatpush.msra.mxu0 0.0
    %661 = vmatpush.msra.mxu0 0.0
    %662 = vmatpush.msra.mxu0 0.0
    %663 = vmatpush.msra.mxu0 0.0
    %664 = vmatpush.msra.mxu0 %v165
    %665 = vmatmul.f32.gmra.mxu0 %v116
    %v666 = vpop.f32.mrf.mxu0
    %v667 = vadd.f32 %v38, %v666
    %668 = vdwg.mxu0
    %669 = vmatpush.msra.mxu0 0.0
    %670 = vmatpush.msra.mxu0 0.0
    %671 = vmatpush.msra.mxu0 0.0
    %672 = vmatpush.msra.mxu0 0.0
    %673 = vmatpush.msra.mxu0 0.0
    %674 = vmatpush.msra.mxu0 0.0
    %675 = vmatpush.msra.mxu0 0.0
    %676 = vmatpush.msra.mxu0 0.0
    %677 = vmatpush.msra.mxu0 0.0
    %678 = vmatpush.msra.mxu0 0.0
    %679 = vmatpush.msra.mxu0 0.0
    %680 = vmatpush.msra.mxu0 0.0
    %681 = vmatpush.msra.mxu0 0.0
    %682 = vmatpush.msra.mxu0 0.0
    %683 = vmatpush.msra.mxu0 0.0
    %684 = vmatpush.msra.mxu0 %v167
    %685 = vmatmul.f32.gmra.mxu0 %v116
    %v686 = vpop.f32.mrf.mxu0
    %v687 = vadd.f32 %v38, %v686
    %688 = vdwg.mxu0
    %689 = vmatpush.msra.mxu0 0.0
    %690 = vmatpush.msra.mxu0 0.0
    %691 = vmatpush.msra.mxu0 0.0
    %692 = vmatpush.msra.mxu0 0.0
    %693 = vmatpush.msra.mxu0 0.0
    %694 = vmatpush.msra.mxu0 0.0
    %695 = vmatpush.msra.mxu0 0.0
    %696 = vmatpush.msra.mxu0 0.0
    %697 = vmatpush.msra.mxu0 0.0
    %698 = vmatpush.msra.mxu0 0.0
    %699 = vmatpush.msra.mxu0 0.0
    %700 = vmatpush.msra.mxu0 0.0
    %701 = vmatpush.msra.mxu0 0.0
    %702 = vmatpush.msra.mxu0 0.0
    %703 = vmatpush.msra.mxu0 0.0
    %704 = vmatpush.msra.mxu0 %v169
    %705 = vmatmul.f32.gmra.mxu0 %v116
    %v706 = vpop.f32.mrf.mxu0
    %v707 = vadd.f32 %v38, %v706
    %708 = vdwg.mxu0
    %709 = vmatpush.msra.mxu0 0.0
    %710 = vmatpush.msra.mxu0 0.0
    %711 = vmatpush.msra.mxu0 0.0
    %712 = vmatpush.msra.mxu0 0.0
    %713 = vmatpush.msra.mxu0 0.0
    %714 = vmatpush.msra.mxu0 0.0
    %715 = vmatpush.msra.mxu0 0.0
    %716 = vmatpush.msra.mxu0 0.0
    %717 = vmatpush.msra.mxu0 0.0
    %718 = vmatpush.msra.mxu0 0.0
    %719 = vmatpush.msra.mxu0 0.0
    %720 = vmatpush.msra.mxu0 0.0
    %721 = vmatpush.msra.mxu0 0.0
    %722 = vmatpush.msra.mxu0 0.0
    %723 = vmatpush.msra.mxu0 0.0
    %724 = vmatpush.msra.mxu0 %v171
    %725 = vmatmul.f32.gmra.mxu0 %v116
    %v726 = vpop.f32.mrf.mxu0
    %v727 = vadd.f32 %v38, %v726
    %728 = vdwg.mxu0
    %729 = vmatpush.msra.mxu0 0.0
    %730 = vmatpush.msra.mxu0 0.0
    %731 = vmatpush.msra.mxu0 0.0
    %732 = vmatpush.msra.mxu0 0.0
    %733 = vmatpush.msra.mxu0 0.0
    %734 = vmatpush.msra.mxu0 0.0
    %735 = vmatpush.msra.mxu0 0.0
    %736 = vmatpush.msra.mxu0 0.0
    %737 = vmatpush.msra.mxu0 0.0
    %738 = vmatpush.msra.mxu0 0.0
    %739 = vmatpush.msra.mxu0 0.0
    %740 = vmatpush.msra.mxu0 0.0
    %741 = vmatpush.msra.mxu0 0.0
    %742 = vmatpush.msra.mxu0 0.0
    %743 = vmatpush.msra.mxu0 0.0
    %744 = vmatpush.msra.mxu0 %v173
    %745 = vmatmul.f32.gmra.mxu0 %v116
    %v746 = vpop.f32.mrf.mxu0
    %v747 = vadd.f32 %v38, %v746
    %748 = vdwg.mxu0
    %749 = vmatpush.msra.mxu0 0.0
    %750 = vmatpush.msra.mxu0 0.0
    %751 = vmatpush.msra.mxu0 0.0
    %752 = vmatpush.msra.mxu0 0.0
    %753 = vmatpush.msra.mxu0 0.0
    %754 = vmatpush.msra.mxu0 0.0
    %755 = vmatpush.msra.mxu0 0.0
    %756 = vmatpush.msra.mxu0 0.0
    %757 = vmatpush.msra.mxu0 0.0
    %758 = vmatpush.msra.mxu0 0.0
    %759 = vmatpush.msra.mxu0 0.0
    %760 = vmatpush.msra.mxu0 0.0
    %761 = vmatpush.msra.mxu0 0.0
    %762 = vmatpush.msra.mxu0 0.0
    %763 = vmatpush.msra.mxu0 0.0
    %764 = vmatpush.msra.mxu0 %v175
    %765 = vmatmul.f32.gmra.mxu0 %v116
    %v766 = vpop.f32.mrf.mxu0
    %v767 = vadd.f32 %v38, %v766
    %768 = vdwg.mxu0
    %769 = vmatpush.msra.mxu0 0.0
    %770 = vmatpush.msra.mxu0 0.0
    %771 = vmatpush.msra.mxu0 0.0
    %772 = vmatpush.msra.mxu0 0.0
    %773 = vmatpush.msra.mxu0 0.0
    %774 = vmatpush.msra.mxu0 0.0
    %775 = vmatpush.msra.mxu0 0.0
    %776 = vmatpush.msra.mxu0 0.0
    %777 = vmatpush.msra.mxu0 0.0
    %778 = vmatpush.msra.mxu0 0.0
    %779 = vmatpush.msra.mxu0 0.0
    %780 = vmatpush.msra.mxu0 0.0
    %781 = vmatpush.msra.mxu0 0.0
    %782 = vmatpush.msra.mxu0 0.0
    %783 = vmatpush.msra.mxu0 0.0
    %784 = vmatpush.msra.mxu0 %v177
    %785 = vmatmul.f32.gmra.mxu0 %v116
    %v786 = vpop.f32.mrf.mxu0
    %v787 = vadd.f32 %v38, %v786
    %788 = vdwg.mxu0
    %789 = vmatpush.msra.mxu0 0.0
    %790 = vmatpush.msra.mxu0 0.0
    %791 = vmatpush.msra.mxu0 0.0
    %792 = vmatpush.msra.mxu0 0.0
    %793 = vmatpush.msra.mxu0 0.0
    %794 = vmatpush.msra.mxu0 0.0
    %795 = vmatpush.msra.mxu0 0.0
    %796 = vmatpush.msra.mxu0 0.0
    %797 = vmatpush.msra.mxu0 0.0
    %798 = vmatpush.msra.mxu0 0.0
    %799 = vmatpush.msra.mxu0 0.0
    %800 = vmatpush.msra.mxu0 0.0
    %801 = vmatpush.msra.mxu0 0.0
    %802 = vmatpush.msra.mxu0 0.0
    %803 = vmatpush.msra.mxu0 0.0
    %804 = vmatpush.msra.mxu0 %v179
    %805 = vmatmul.f32.gmra.mxu0 %v116
    %v806 = vpop.f32.mrf.mxu0
    %v807 = vadd.f32 %v38, %v806
    %808 = vdwg.mxu0
    %809 = vmatpush.msra.mxu0 0.0
    %810 = vmatpush.msra.mxu0 0.0
    %811 = vmatpush.msra.mxu0 0.0
    %812 = vmatpush.msra.mxu0 0.0
    %813 = vmatpush.msra.mxu0 0.0
    %814 = vmatpush.msra.mxu0 0.0
    %815 = vmatpush.msra.mxu0 0.0
    %816 = vmatpush.msra.mxu0 0.0
    %817 = vmatpush.msra.mxu0 0.0
    %818 = vmatpush.msra.mxu0 0.0
    %819 = vmatpush.msra.mxu0 0.0
    %820 = vmatpush.msra.mxu0 0.0
    %821 = vmatpush.msra.mxu0 0.0
    %822 = vmatpush.msra.mxu0 0.0
    %823 = vmatpush.msra.mxu0 0.0
    %824 = vmatpush.msra.mxu0 %v181
    %825 = vmatmul.f32.gmra.mxu0 %v116
    %v826 = vpop.f32.mrf.mxu0
    %v827 = vadd.f32 %v38, %v826
    %828 = vdwg.mxu0
    %829 = vmatpush.msra.mxu0 0.0
    %830 = vmatpush.msra.mxu0 0.0
    %831 = vmatpush.msra.mxu0 0.0
    %832 = vmatpush.msra.mxu0 0.0
    %833 = vmatpush.msra.mxu0 0.0
    %834 = vmatpush.msra.mxu0 0.0
    %835 = vmatpush.msra.mxu0 0.0
    %836 = vmatpush.msra.mxu0 0.0
    %837 = vmatpush.msra.mxu0 0.0
    %838 = vmatpush.msra.mxu0 0.0
    %839 = vmatpush.msra.mxu0 0.0
    %840 = vmatpush.msra.mxu0 0.0
    %841 = vmatpush.msra.mxu0 0.0
    %842 = vmatpush.msra.mxu0 0.0
    %843 = vmatpush.msra.mxu0 0.0
    %844 = vmatpush.msra.mxu0 %v183
    %845 = vmatmul.f32.gmra.mxu0 %v116
    %v846 = vpop.f32.mrf.mxu0
    %v847 = vadd.f32 %v38, %v846
    %848 = vdwg.mxu0
    %849 = vmatpush.msra.mxu0 0.0
    %850 = vmatpush.msra.mxu0 0.0
    %851 = vmatpush.msra.mxu0 0.0
    %852 = vmatpush.msra.mxu0 0.0
    %853 = vmatpush.msra.mxu0 0.0
    %854 = vmatpush.msra.mxu0 0.0
    %855 = vmatpush.msra.mxu0 0.0
    %856 = vmatpush.msra.mxu0 0.0
    %857 = vmatpush.msra.mxu0 0.0
    %858 = vmatpush.msra.mxu0 0.0
    %859 = vmatpush.msra.mxu0 0.0
    %860 = vmatpush.msra.mxu0 0.0
    %861 = vmatpush.msra.mxu0 0.0
    %862 = vmatpush.msra.mxu0 0.0
    %863 = vmatpush.msra.mxu0 0.0
    %864 = vmatpush.msra.mxu0 %v185
    %865 = vmatmul.f32.gmra.mxu0 %v116
    %v866 = vpop.f32.mrf.mxu0
    %v867 = vadd.f32 %v38, %v866
    %868 = vdwg.mxu0
    %869 = vmatpush.msra.mxu0 0.0
    %870 = vmatpush.msra.mxu0 0.0
    %871 = vmatpush.msra.mxu0 0.0
    %872 = vmatpush.msra.mxu0 0.0
    %873 = vmatpush.msra.mxu0 0.0
    %874 = vmatpush.msra.mxu0 0.0
    %875 = vmatpush.msra.mxu0 0.0
    %876 = vmatpush.msra.mxu0 0.0
    %877 = vmatpush.msra.mxu0 0.0
    %878 = vmatpush.msra.mxu0 0.0
    %879 = vmatpush.msra.mxu0 0.0
    %880 = vmatpush.msra.mxu0 0.0
    %881 = vmatpush.msra.mxu0 0.0
    %882 = vmatpush.msra.mxu0 0.0
    %883 = vmatpush.msra.mxu0 0.0
    %884 = vmatpush.msra.mxu0 %v187
    %885 = vmatmul.f32.gmra.mxu0 %v116
    %v886 = vpop.f32.mrf.mxu0
    %v887 = vadd.f32 %v38, %v886
    %888 = vdwg.mxu0
    %889 = vst [vmem:[#allocation2] sm:$0xff] %v207
    %890 = vst [vmem:[#allocation2 + $0x8] sm:$0xff] %v227
    %891 = vst [vmem:[#allocation2 + $0x10] sm:$0xff] %v247
    %892 = vst [vmem:[#allocation2 + $0x18] sm:$0xff] %v267
    %893 = vst [vmem:[#allocation2 + $0x20] sm:$0xff] %v287
    %894 = vst [vmem:[#allocation2 + $0x28] sm:$0xff] %v307
    %895 = vst [vmem:[#allocation2 + $0x30] sm:$0xff] %v327
    %896 = vst [vmem:[#allocation2 + $0x38] sm:$0xff] %v347
    %897 = vst [vmem:[#allocation2 + $0x40] sm:$0xff] %v367
    %898 = vst [vmem:[#allocation2 + $0x48] sm:$0xff] %v387
    %899 = vst [vmem:[#allocation2 + $0x50] sm:$0xff] %v407
    %900 = vst [vmem:[#allocation2 + $0x58] sm:$0xff] %v427
    %901 = vst [vmem:[#allocation2 + $0x60] sm:$0xff] %v447
    %902 = vst [vmem:[#allocation2 + $0x68] sm:$0xff] %v467
    %903 = vst [vmem:[#allocation2 + $0x70] sm:$0xff] %v487
    %904 = vst [vmem:[#allocation2 + $0x78] sm:$0xff] %v507
    %905 = vst [vmem:[#allocation2 + $0x80] sm:$0xff] %v527
    %906 = vst [vmem:[#allocation2 + $0x88] sm:$0xff] %v547
    %907 = vst [vmem:[#allocation2 + $0x90] sm:$0xff] %v567
    %908 = vst [vmem:[#allocation2 + $0x98] sm:$0xff] %v587
    %909 = vst [vmem:[#allocation2 + $0xa0] sm:$0xff] %v607
    %910 = vst [vmem:[#allocation2 + $0xa8] sm:$0xff] %v627
    %911 = vst [vmem:[#allocation2 + $0xb0] sm:$0xff] %v647
    %912 = vst [vmem:[#allocation2 + $0xb8] sm:$0xff] %v667
    %913 = vst [vmem:[#allocation2 + $0xc0] sm:$0xff] %v687
    %914 = vst [vmem:[#allocation2 + $0xc8] sm:$0xff] %v707
    %915 = vst [vmem:[#allocation2 + $0xd0] sm:$0xff] %v727
    %916 = vst [vmem:[#allocation2 + $0xd8] sm:$0xff] %v747
    %917 = vst [vmem:[#allocation2 + $0xe0] sm:$0xff] %v767
    %918 = vst [vmem:[#allocation2 + $0xe8] sm:$0xff] %v787
    %919 = vst [vmem:[#allocation2 + $0xf0] sm:$0xff] %v807
    %920 = vst [vmem:[#allocation2 + $0xf8] sm:$0xff] %v827
    %921 = vst [vmem:[#allocation2 + $0x100] sm:$0xff] %v847
    %922 = vst [vmem:[#allocation2 + $0x108] sm:$0xff] %v867
    %923 = vst [vmem:[#allocation2 + $0x110] sm:$0xff] %v887
    %s924 = scalar_lea.vmem %s0, 140
    %v925 = vld [vmem:[%s924] sm:$0x77]
    %v926 = vld [vmem:[%s924 + $0x8] sm:$0x77]
    %v927 = vld [vmem:[%s924 + $0x10] sm:$0x77]
    %v928 = vld [vmem:[%s924 + $0x18] sm:$0x77]
    %v929 = vld [vmem:[%s924 + $0x20] sm:$0x77]
    %v930 = vld [vmem:[%s924 + $0x28] sm:$0x77]
    %v931 = vld [vmem:[%s924 + $0x30] sm:$0x77]
    %v932 = vld [vmem:[%s924 + $0x38] sm:$0x77]
    %v933 = vld [vmem:[%s924 + $0x40] sm:$0x77]
    %v934 = vld [vmem:[%s924 + $0x48] sm:$0x77]
    %v935 = vld [vmem:[%s924 + $0x50] sm:$0x77]
    %v936 = vld [vmem:[%s924 + $0x58] sm:$0x77]
    %v937 = vld [vmem:[%s924 + $0x60] sm:$0x77]
    %v938 = vld [vmem:[%s924 + $0x68] sm:$0x77]
    %v939 = vld [vmem:[%s924 + $0x70] sm:$0x77]
    %v940 = vld [vmem:[%s924 + $0x78] sm:$0x77]
    %v941 = vld [vmem:[%s924 + $0x80] sm:$0x77]
    %v942 = vld [vmem:[%s924 + $0x88] sm:$0x7]
    %961 = vst [vmem:[#allocation1] ss:$2 sm:$0xff] %v925
    %s962 = scalar_lea.vmem [#allocation1], 16
    %963 = vst [vmem:[%s962] ss:$2 sm:$0xff] %v926
    %s964 = scalar_lea.vmem [#allocation1], 32
    %965 = vst [vmem:[%s964] ss:$2 sm:$0xff] %v927
    %s966 = scalar_lea.vmem [#allocation1], 48
    %967 = vst [vmem:[%s966] ss:$2 sm:$0xff] %v928
    %v968 = vld.sshfl [vmem:[#allocation1] sm:$0xff pattern:$0x75316420]
    %v969 = vld.sshfl [vmem:[#allocation1 + $0x8] sm:$0xff pattern:$0x75316420]
    %v970 = vld.sshfl [vmem:[#allocation1 + $0x10] sm:$0xff pattern:$0x75316420]
    %v971 = vld.sshfl [vmem:[#allocation1 + $0x18] sm:$0xff pattern:$0x75316420]
    %v972 = vld.sshfl [vmem:[#allocation1 + $0x20] sm:$0xff pattern:$0x75316420]
    %v973 = vld.sshfl [vmem:[#allocation1 + $0x28] sm:$0xff pattern:$0x75316420]
    %v974 = vld.sshfl [vmem:[#allocation1 + $0x30] sm:$0xff pattern:$0x75316420]
    %v975 = vld.sshfl [vmem:[#allocation1 + $0x38] sm:$0xff pattern:$0x75316420]
    %976 = vst [vmem:[#allocation1] ss:$2 sm:$0xff] %v929
    %977 = vst [vmem:[%s962] ss:$2 sm:$0xff] %v930
    %978 = vst [vmem:[%s964] ss:$2 sm:$0xff] %v931
    %979 = vst [vmem:[%s966] ss:$2 sm:$0xff] %v932
    %v980 = vld.sshfl [vmem:[#allocation1] sm:$0xff pattern:$0x75316420]
    %v981 = vld.sshfl [vmem:[#allocation1 + $0x8] sm:$0xff pattern:$0x75316420]
    %v982 = vld.sshfl [vmem:[#allocation1 + $0x10] sm:$0xff pattern:$0x75316420]
    %v983 = vld.sshfl [vmem:[#allocation1 + $0x18] sm:$0xff pattern:$0x75316420]
    %v984 = vld.sshfl [vmem:[#allocation1 + $0x20] sm:$0xff pattern:$0x75316420]
    %v985 = vld.sshfl [vmem:[#allocation1 + $0x28] sm:$0xff pattern:$0x75316420]
    %v986 = vld.sshfl [vmem:[#allocation1 + $0x30] sm:$0xff pattern:$0x75316420]
    %v987 = vld.sshfl [vmem:[#allocation1 + $0x38] sm:$0xff pattern:$0x75316420]
    %988 = vst [vmem:[#allocation1] ss:$2 sm:$0xff] %v933
    %989 = vst [vmem:[%s962] ss:$2 sm:$0xff] %v934
    %990 = vst [vmem:[%s964] ss:$2 sm:$0xff] %v935
    %991 = vst [vmem:[%s966] ss:$2 sm:$0xff] %v936
    %v992 = vld.sshfl [vmem:[#allocation1] sm:$0xff pattern:$0x75316420]
    %v993 = vld.sshfl [vmem:[#allocation1 + $0x8] sm:$0xff pattern:$0x75316420]
    %v994 = vld.sshfl [vmem:[#allocation1 + $0x10] sm:$0xff pattern:$0x75316420]
    %v995 = vld.sshfl [vmem:[#allocation1 + $0x18] sm:$0xff pattern:$0x75316420]
    %v996 = vld.sshfl [vmem:[#allocation1 + $0x20] sm:$0xff pattern:$0x75316420]
    %v997 = vld.sshfl [vmem:[#allocation1 + $0x28] sm:$0xff pattern:$0x75316420]
    %v998 = vld.sshfl [vmem:[#allocation1 + $0x30] sm:$0xff pattern:$0x75316420]
    %v999 = vld.sshfl [vmem:[#allocation1 + $0x38] sm:$0xff pattern:$0x75316420]
    %1000 = vst [vmem:[#allocation1] ss:$2 sm:$0xff] %v937
    %1001 = vst [vmem:[%s962] ss:$2 sm:$0xff] %v938
    %1002 = vst [vmem:[%s964] ss:$2 sm:$0xff] %v939
    %1003 = vst [vmem:[%s966] ss:$2 sm:$0xff] %v940
    %v1004 = vld.sshfl [vmem:[#allocation1] sm:$0xff pattern:$0x75316420]
    %v1005 = vld.sshfl [vmem:[#allocation1 + $0x8] sm:$0xff pattern:$0x75316420]
    %v1006 = vld.sshfl [vmem:[#allocation1 + $0x10] sm:$0xff pattern:$0x75316420]
    %v1007 = vld.sshfl [vmem:[#allocation1 + $0x18] sm:$0xff pattern:$0x75316420]
    %v1008 = vld.sshfl [vmem:[#allocation1 + $0x20] sm:$0xff pattern:$0x75316420]
    %v1009 = vld.sshfl [vmem:[#allocation1 + $0x28] sm:$0xff pattern:$0x75316420]
    %v1010 = vld.sshfl [vmem:[#allocation1 + $0x30] sm:$0xff pattern:$0x75316420]
    %v1011 = vld.sshfl [vmem:[#allocation1 + $0x38] sm:$0xff pattern:$0x75316420]
    %1012 = vst [vmem:[#allocation1] ss:$2 sm:$0xff] %v941
    %1013 = vst [vmem:[%s962] ss:$2 sm:$0xff] %v942
    %v1014 = vld.sshfl [vmem:[#allocation1] sm:$0xff pattern:$0x75316420]
    %v1015 = vld.sshfl [vmem:[#allocation1 + $0x8] sm:$0xff pattern:$0x75316420]
    %v1016 = vld.sshfl [vmem:[#allocation1 + $0x10] sm:$0xff pattern:$0x75316420]
    %v1017 = vsel %vm118, %v968, 0
    %v1019 = vsel %vm118, %v969, 0
    %v1021 = vsel %vm118, %v970, 0
    %v1023 = vsel %vm118, %v971, 0
    %v1025 = vsel %vm118, %v972, 0
    %v1027 = vsel %vm118, %v973, 0
    %v1029 = vsel %vm118, %v974, 0
    %v1031 = vsel %vm118, %v975, 0
    %v1033 = vsel %vm118, %v980, 0
    %v1035 = vsel %vm118, %v981, 0
    %v1037 = vsel %vm118, %v982, 0
    %v1039 = vsel %vm118, %v983, 0
    %v1041 = vsel %vm118, %v984, 0
    %v1043 = vsel %vm118, %v985, 0
    %v1045 = vsel %vm118, %v986, 0
    %v1047 = vsel %vm118, %v987, 0
    %v1049 = vsel %vm118, %v992, 0
    %v1051 = vsel %vm118, %v993, 0
    %v1053 = vsel %vm118, %v994, 0
    %v1055 = vsel %vm118, %v995, 0
    %v1057 = vsel %vm118, %v996, 0
    %v1059 = vsel %vm118, %v997, 0
    %v1061 = vsel %vm118, %v998, 0
    %v1063 = vsel %vm118, %v999, 0
    %v1065 = vsel %vm118, %v1004, 0
    %v1067 = vsel %vm118, %v1005, 0
    %v1069 = vsel %vm118, %v1006, 0
    %v1071 = vsel %vm118, %v1007, 0
    %v1073 = vsel %vm118, %v1008, 0
    %v1075 = vsel %vm118, %v1009, 0
    %v1077 = vsel %vm118, %v1010, 0
    %v1079 = vsel %vm118, %v1011, 0
    %v1081 = vsel %vm118, %v1014, 0
    %v1083 = vsel %vm118, %v1015, 0
    %v1085 = vsel %vm118, %v1016, 0
    %1087 = vmatpush.msra.mxu0 0.0
    %1088 = vmatpush.msra.mxu0 0.0
    %1089 = vmatpush.msra.mxu0 0.0
    %1090 = vmatpush.msra.mxu0 0.0
    %1091 = vmatpush.msra.mxu0 0.0
    %1092 = vmatpush.msra.mxu0 0.0
    %1093 = vmatpush.msra.mxu0 0.0
    %1094 = vmatpush.msra.mxu0 0.0
    %1095 = vmatpush.msra.mxu0 0.0
    %1096 = vmatpush.msra.mxu0 0.0
    %1097 = vmatpush.msra.mxu0 0.0
    %1098 = vmatpush.msra.mxu0 0.0
    %1099 = vmatpush.msra.mxu0 0.0
    %1100 = vmatpush.msra.mxu0 0.0
    %1101 = vmatpush.msra.mxu0 0.0
    %1102 = vmatpush.msra.mxu0 %v1017
    %1103 = vmatmul.f32.gmra.mxu0 %v116
    %v1104 = vpop.f32.mrf.mxu0
    %v1105 = vadd.f32 %v38, %v1104
    %1106 = vdwg.mxu0
    %1107 = vmatpush.msra.mxu0 0.0
    %1108 = vmatpush.msra.mxu0 0.0
    %1109 = vmatpush.msra.mxu0 0.0
    %1110 = vmatpush.msra.mxu0 0.0
    %1111 = vmatpush.msra.mxu0 0.0
    %1112 = vmatpush.msra.mxu0 0.0
    %1113 = vmatpush.msra.mxu0 0.0
    %1114 = vmatpush.msra.mxu0 0.0
    %1115 = vmatpush.msra.mxu0 0.0
    %1116 = vmatpush.msra.mxu0 0.0
    %1117 = vmatpush.msra.mxu0 0.0
    %1118 = vmatpush.msra.mxu0 0.0
    %1119 = vmatpush.msra.mxu0 0.0
    %1120 = vmatpush.msra.mxu0 0.0
    %1121 = vmatpush.msra.mxu0 0.0
    %1122 = vmatpush.msra.mxu0 %v1019
    %1123 = vmatmul.f32.gmra.mxu0 %v116
    %v1124 = vpop.f32.mrf.mxu0
    %v1125 = vadd.f32 %v38, %v1124
    %1126 = vdwg.mxu0
    %1127 = vmatpush.msra.mxu0 0.0
    %1128 = vmatpush.msra.mxu0 0.0
    %1129 = vmatpush.msra.mxu0 0.0
    %1130 = vmatpush.msra.mxu0 0.0
    %1131 = vmatpush.msra.mxu0 0.0
    %1132 = vmatpush.msra.mxu0 0.0
    %1133 = vmatpush.msra.mxu0 0.0
    %1134 = vmatpush.msra.mxu0 0.0
    %1135 = vmatpush.msra.mxu0 0.0
    %1136 = vmatpush.msra.mxu0 0.0
    %1137 = vmatpush.msra.mxu0 0.0
    %1138 = vmatpush.msra.mxu0 0.0
    %1139 = vmatpush.msra.mxu0 0.0
    %1140 = vmatpush.msra.mxu0 0.0
    %1141 = vmatpush.msra.mxu0 0.0
    %1142 = vmatpush.msra.mxu0 %v1021
    %1143 = vmatmul.f32.gmra.mxu0 %v116
    %v1144 = vpop.f32.mrf.mxu0
    %v1145 = vadd.f32 %v38, %v1144
    %1146 = vdwg.mxu0
    %1147 = vmatpush.msra.mxu0 0.0
    %1148 = vmatpush.msra.mxu0 0.0
    %1149 = vmatpush.msra.mxu0 0.0
    %1150 = vmatpush.msra.mxu0 0.0
    %1151 = vmatpush.msra.mxu0 0.0
    %1152 = vmatpush.msra.mxu0 0.0
    %1153 = vmatpush.msra.mxu0 0.0
    %1154 = vmatpush.msra.mxu0 0.0
    %1155 = vmatpush.msra.mxu0 0.0
    %1156 = vmatpush.msra.mxu0 0.0
    %1157 = vmatpush.msra.mxu0 0.0
    %1158 = vmatpush.msra.mxu0 0.0
    %1159 = vmatpush.msra.mxu0 0.0
    %1160 = vmatpush.msra.mxu0 0.0
    %1161 = vmatpush.msra.mxu0 0.0
    %1162 = vmatpush.msra.mxu0 %v1023
    %1163 = vmatmul.f32.gmra.mxu0 %v116
    %v1164 = vpop.f32.mrf.mxu0
    %v1165 = vadd.f32 %v38, %v1164
    %1166 = vdwg.mxu0
    %1167 = vmatpush.msra.mxu0 0.0
    %1168 = vmatpush.msra.mxu0 0.0
    %1169 = vmatpush.msra.mxu0 0.0
    %1170 = vmatpush.msra.mxu0 0.0
    %1171 = vmatpush.msra.mxu0 0.0
    %1172 = vmatpush.msra.mxu0 0.0
    %1173 = vmatpush.msra.mxu0 0.0
    %1174 = vmatpush.msra.mxu0 0.0
    %1175 = vmatpush.msra.mxu0 0.0
    %1176 = vmatpush.msra.mxu0 0.0
    %1177 = vmatpush.msra.mxu0 0.0
    %1178 = vmatpush.msra.mxu0 0.0
    %1179 = vmatpush.msra.mxu0 0.0
    %1180 = vmatpush.msra.mxu0 0.0
    %1181 = vmatpush.msra.mxu0 0.0
    %1182 = vmatpush.msra.mxu0 %v1025
    %1183 = vmatmul.f32.gmra.mxu0 %v116
    %v1184 = vpop.f32.mrf.mxu0
    %v1185 = vadd.f32 %v38, %v1184
    %1186 = vdwg.mxu0
    %1187 = vmatpush.msra.mxu0 0.0
    %1188 = vmatpush.msra.mxu0 0.0
    %1189 = vmatpush.msra.mxu0 0.0
    %1190 = vmatpush.msra.mxu0 0.0
    %1191 = vmatpush.msra.mxu0 0.0
    %1192 = vmatpush.msra.mxu0 0.0
    %1193 = vmatpush.msra.mxu0 0.0
    %1194 = vmatpush.msra.mxu0 0.0
    %1195 = vmatpush.msra.mxu0 0.0
    %1196 = vmatpush.msra.mxu0 0.0
    %1197 = vmatpush.msra.mxu0 0.0
    %1198 = vmatpush.msra.mxu0 0.0
    %1199 = vmatpush.msra.mxu0 0.0
    %1200 = vmatpush.msra.mxu0 0.0
    %1201 = vmatpush.msra.mxu0 0.0
    %1202 = vmatpush.msra.mxu0 %v1027
    %1203 = vmatmul.f32.gmra.mxu0 %v116
    %v1204 = vpop.f32.mrf.mxu0
    %v1205 = vadd.f32 %v38, %v1204
    %1206 = vdwg.mxu0
    %1207 = vmatpush.msra.mxu0 0.0
    %1208 = vmatpush.msra.mxu0 0.0
    %1209 = vmatpush.msra.mxu0 0.0
    %1210 = vmatpush.msra.mxu0 0.0
    %1211 = vmatpush.msra.mxu0 0.0
    %1212 = vmatpush.msra.mxu0 0.0
    %1213 = vmatpush.msra.mxu0 0.0
    %1214 = vmatpush.msra.mxu0 0.0
    %1215 = vmatpush.msra.mxu0 0.0
    %1216 = vmatpush.msra.mxu0 0.0
    %1217 = vmatpush.msra.mxu0 0.0
    %1218 = vmatpush.msra.mxu0 0.0
    %1219 = vmatpush.msra.mxu0 0.0
    %1220 = vmatpush.msra.mxu0 0.0
    %1221 = vmatpush.msra.mxu0 0.0
    %1222 = vmatpush.msra.mxu0 %v1029
    %1223 = vmatmul.f32.gmra.mxu0 %v116
    %v1224 = vpop.f32.mrf.mxu0
    %v1225 = vadd.f32 %v38, %v1224
    %1226 = vdwg.mxu0
    %1227 = vmatpush.msra.mxu0 0.0
    %1228 = vmatpush.msra.mxu0 0.0
    %1229 = vmatpush.msra.mxu0 0.0
    %1230 = vmatpush.msra.mxu0 0.0
    %1231 = vmatpush.msra.mxu0 0.0
    %1232 = vmatpush.msra.mxu0 0.0
    %1233 = vmatpush.msra.mxu0 0.0
    %1234 = vmatpush.msra.mxu0 0.0
    %1235 = vmatpush.msra.mxu0 0.0
    %1236 = vmatpush.msra.mxu0 0.0
    %1237 = vmatpush.msra.mxu0 0.0
    %1238 = vmatpush.msra.mxu0 0.0
    %1239 = vmatpush.msra.mxu0 0.0
    %1240 = vmatpush.msra.mxu0 0.0
    %1241 = vmatpush.msra.mxu0 0.0
    %1242 = vmatpush.msra.mxu0 %v1031
    %1243 = vmatmul.f32.gmra.mxu0 %v116
    %v1244 = vpop.f32.mrf.mxu0
    %v1245 = vadd.f32 %v38, %v1244
    %1246 = vdwg.mxu0
    %1247 = vmatpush.msra.mxu0 0.0
    %1248 = vmatpush.msra.mxu0 0.0
    %1249 = vmatpush.msra.mxu0 0.0
    %1250 = vmatpush.msra.mxu0 0.0
    %1251 = vmatpush.msra.mxu0 0.0
    %1252 = vmatpush.msra.mxu0 0.0
    %1253 = vmatpush.msra.mxu0 0.0
    %1254 = vmatpush.msra.mxu0 0.0
    %1255 = vmatpush.msra.mxu0 0.0
    %1256 = vmatpush.msra.mxu0 0.0
    %1257 = vmatpush.msra.mxu0 0.0
    %1258 = vmatpush.msra.mxu0 0.0
    %1259 = vmatpush.msra.mxu0 0.0
    %1260 = vmatpush.msra.mxu0 0.0
    %1261 = vmatpush.msra.mxu0 0.0
    %1262 = vmatpush.msra.mxu0 %v1033
    %1263 = vmatmul.f32.gmra.mxu0 %v116
    %v1264 = vpop.f32.mrf.mxu0
    %v1265 = vadd.f32 %v38, %v1264
    %1266 = vdwg.mxu0
    %1267 = vmatpush.msra.mxu0 0.0
    %1268 = vmatpush.msra.mxu0 0.0
    %1269 = vmatpush.msra.mxu0 0.0
    %1270 = vmatpush.msra.mxu0 0.0
    %1271 = vmatpush.msra.mxu0 0.0
    %1272 = vmatpush.msra.mxu0 0.0
    %1273 = vmatpush.msra.mxu0 0.0
    %1274 = vmatpush.msra.mxu0 0.0
    %1275 = vmatpush.msra.mxu0 0.0
    %1276 = vmatpush.msra.mxu0 0.0
    %1277 = vmatpush.msra.mxu0 0.0
    %1278 = vmatpush.msra.mxu0 0.0
    %1279 = vmatpush.msra.mxu0 0.0
    %1280 = vmatpush.msra.mxu0 0.0
    %1281 = vmatpush.msra.mxu0 0.0
    %1282 = vmatpush.msra.mxu0 %v1035
    %1283 = vmatmul.f32.gmra.mxu0 %v116
    %v1284 = vpop.f32.mrf.mxu0
    %v1285 = vadd.f32 %v38, %v1284
    %1286 = vdwg.mxu0
    %1287 = vmatpush.msra.mxu0 0.0
    %1288 = vmatpush.msra.mxu0 0.0
    %1289 = vmatpush.msra.mxu0 0.0
    %1290 = vmatpush.msra.mxu0 0.0
    %1291 = vmatpush.msra.mxu0 0.0
    %1292 = vmatpush.msra.mxu0 0.0
    %1293 = vmatpush.msra.mxu0 0.0
    %1294 = vmatpush.msra.mxu0 0.0
    %1295 = vmatpush.msra.mxu0 0.0
    %1296 = vmatpush.msra.mxu0 0.0
    %1297 = vmatpush.msra.mxu0 0.0
    %1298 = vmatpush.msra.mxu0 0.0
    %1299 = vmatpush.msra.mxu0 0.0
    %1300 = vmatpush.msra.mxu0 0.0
    %1301 = vmatpush.msra.mxu0 0.0
    %1302 = vmatpush.msra.mxu0 %v1037
    %1303 = vmatmul.f32.gmra.mxu0 %v116
    %v1304 = vpop.f32.mrf.mxu0
    %v1305 = vadd.f32 %v38, %v1304
    %1306 = vdwg.mxu0
    %1307 = vmatpush.msra.mxu0 0.0
    %1308 = vmatpush.msra.mxu0 0.0
    %1309 = vmatpush.msra.mxu0 0.0
    %1310 = vmatpush.msra.mxu0 0.0
    %1311 = vmatpush.msra.mxu0 0.0
    %1312 = vmatpush.msra.mxu0 0.0
    %1313 = vmatpush.msra.mxu0 0.0
    %1314 = vmatpush.msra.mxu0 0.0
    %1315 = vmatpush.msra.mxu0 0.0
    %1316 = vmatpush.msra.mxu0 0.0
    %1317 = vmatpush.msra.mxu0 0.0
    %1318 = vmatpush.msra.mxu0 0.0
    %1319 = vmatpush.msra.mxu0 0.0
    %1320 = vmatpush.msra.mxu0 0.0
    %1321 = vmatpush.msra.mxu0 0.0
    %1322 = vmatpush.msra.mxu0 %v1039
    %1323 = vmatmul.f32.gmra.mxu0 %v116
    %v1324 = vpop.f32.mrf.mxu0
    %v1325 = vadd.f32 %v38, %v1324
    %1326 = vdwg.mxu0
    %1327 = vmatpush.msra.mxu0 0.0
    %1328 = vmatpush.msra.mxu0 0.0
    %1329 = vmatpush.msra.mxu0 0.0
    %1330 = vmatpush.msra.mxu0 0.0
    %1331 = vmatpush.msra.mxu0 0.0
    %1332 = vmatpush.msra.mxu0 0.0
    %1333 = vmatpush.msra.mxu0 0.0
    %1334 = vmatpush.msra.mxu0 0.0
    %1335 = vmatpush.msra.mxu0 0.0
    %1336 = vmatpush.msra.mxu0 0.0
    %1337 = vmatpush.msra.mxu0 0.0
    %1338 = vmatpush.msra.mxu0 0.0
    %1339 = vmatpush.msra.mxu0 0.0
    %1340 = vmatpush.msra.mxu0 0.0
    %1341 = vmatpush.msra.mxu0 0.0
    %1342 = vmatpush.msra.mxu0 %v1041
    %1343 = vmatmul.f32.gmra.mxu0 %v116
    %v1344 = vpop.f32.mrf.mxu0
    %v1345 = vadd.f32 %v38, %v1344
    %1346 = vdwg.mxu0
    %1347 = vmatpush.msra.mxu0 0.0
    %1348 = vmatpush.msra.mxu0 0.0
    %1349 = vmatpush.msra.mxu0 0.0
    %1350 = vmatpush.msra.mxu0 0.0
    %1351 = vmatpush.msra.mxu0 0.0
    %1352 = vmatpush.msra.mxu0 0.0
    %1353 = vmatpush.msra.mxu0 0.0
    %1354 = vmatpush.msra.mxu0 0.0
    %1355 = vmatpush.msra.mxu0 0.0
    %1356 = vmatpush.msra.mxu0 0.0
    %1357 = vmatpush.msra.mxu0 0.0
    %1358 = vmatpush.msra.mxu0 0.0
    %1359 = vmatpush.msra.mxu0 0.0
    %1360 = vmatpush.msra.mxu0 0.0
    %1361 = vmatpush.msra.mxu0 0.0
    %1362 = vmatpush.msra.mxu0 %v1043
    %1363 = vmatmul.f32.gmra.mxu0 %v116
    %v1364 = vpop.f32.mrf.mxu0
    %v1365 = vadd.f32 %v38, %v1364
    %1366 = vdwg.mxu0
    %1367 = vmatpush.msra.mxu0 0.0
    %1368 = vmatpush.msra.mxu0 0.0
    %1369 = vmatpush.msra.mxu0 0.0
    %1370 = vmatpush.msra.mxu0 0.0
    %1371 = vmatpush.msra.mxu0 0.0
    %1372 = vmatpush.msra.mxu0 0.0
    %1373 = vmatpush.msra.mxu0 0.0
    %1374 = vmatpush.msra.mxu0 0.0
    %1375 = vmatpush.msra.mxu0 0.0
    %1376 = vmatpush.msra.mxu0 0.0
    %1377 = vmatpush.msra.mxu0 0.0
    %1378 = vmatpush.msra.mxu0 0.0
    %1379 = vmatpush.msra.mxu0 0.0
    %1380 = vmatpush.msra.mxu0 0.0
    %1381 = vmatpush.msra.mxu0 0.0
    %1382 = vmatpush.msra.mxu0 %v1045
    %1383 = vmatmul.f32.gmra.mxu0 %v116
    %v1384 = vpop.f32.mrf.mxu0
    %v1385 = vadd.f32 %v38, %v1384
    %1386 = vdwg.mxu0
    %1387 = vmatpush.msra.mxu0 0.0
    %1388 = vmatpush.msra.mxu0 0.0
    %1389 = vmatpush.msra.mxu0 0.0
    %1390 = vmatpush.msra.mxu0 0.0
    %1391 = vmatpush.msra.mxu0 0.0
    %1392 = vmatpush.msra.mxu0 0.0
    %1393 = vmatpush.msra.mxu0 0.0
    %1394 = vmatpush.msra.mxu0 0.0
    %1395 = vmatpush.msra.mxu0 0.0
    %1396 = vmatpush.msra.mxu0 0.0
    %1397 = vmatpush.msra.mxu0 0.0
    %1398 = vmatpush.msra.mxu0 0.0
    %1399 = vmatpush.msra.mxu0 0.0
    %1400 = vmatpush.msra.mxu0 0.0
    %1401 = vmatpush.msra.mxu0 0.0
    %1402 = vmatpush.msra.mxu0 %v1047
    %1403 = vmatmul.f32.gmra.mxu0 %v116
    %v1404 = vpop.f32.mrf.mxu0
    %v1405 = vadd.f32 %v38, %v1404
    %1406 = vdwg.mxu0
    %1407 = vmatpush.msra.mxu0 0.0
    %1408 = vmatpush.msra.mxu0 0.0
    %1409 = vmatpush.msra.mxu0 0.0
    %1410 = vmatpush.msra.mxu0 0.0
    %1411 = vmatpush.msra.mxu0 0.0
    %1412 = vmatpush.msra.mxu0 0.0
    %1413 = vmatpush.msra.mxu0 0.0
    %1414 = vmatpush.msra.mxu0 0.0
    %1415 = vmatpush.msra.mxu0 0.0
    %1416 = vmatpush.msra.mxu0 0.0
    %1417 = vmatpush.msra.mxu0 0.0
    %1418 = vmatpush.msra.mxu0 0.0
    %1419 = vmatpush.msra.mxu0 0.0
    %1420 = vmatpush.msra.mxu0 0.0
    %1421 = vmatpush.msra.mxu0 0.0
    %1422 = vmatpush.msra.mxu0 %v1049
    %1423 = vmatmul.f32.gmra.mxu0 %v116
    %v1424 = vpop.f32.mrf.mxu0
    %v1425 = vadd.f32 %v38, %v1424
    %1426 = vdwg.mxu0
    %1427 = vmatpush.msra.mxu0 0.0
    %1428 = vmatpush.msra.mxu0 0.0
    %1429 = vmatpush.msra.mxu0 0.0
    %1430 = vmatpush.msra.mxu0 0.0
    %1431 = vmatpush.msra.mxu0 0.0
    %1432 = vmatpush.msra.mxu0 0.0
    %1433 = vmatpush.msra.mxu0 0.0
    %1434 = vmatpush.msra.mxu0 0.0
    %1435 = vmatpush.msra.mxu0 0.0
    %1436 = vmatpush.msra.mxu0 0.0
    %1437 = vmatpush.msra.mxu0 0.0
    %1438 = vmatpush.msra.mxu0 0.0
    %1439 = vmatpush.msra.mxu0 0.0
    %1440 = vmatpush.msra.mxu0 0.0
    %1441 = vmatpush.msra.mxu0 0.0
    %1442 = vmatpush.msra.mxu0 %v1051
    %1443 = vmatmul.f32.gmra.mxu0 %v116
    %v1444 = vpop.f32.mrf.mxu0
    %v1445 = vadd.f32 %v38, %v1444
    %1446 = vdwg.mxu0
    %1447 = vmatpush.msra.mxu0 0.0
    %1448 = vmatpush.msra.mxu0 0.0
    %1449 = vmatpush.msra.mxu0 0.0
    %1450 = vmatpush.msra.mxu0 0.0
    %1451 = vmatpush.msra.mxu0 0.0
    %1452 = vmatpush.msra.mxu0 0.0
    %1453 = vmatpush.msra.mxu0 0.0
    %1454 = vmatpush.msra.mxu0 0.0
    %1455 = vmatpush.msra.mxu0 0.0
    %1456 = vmatpush.msra.mxu0 0.0
    %1457 = vmatpush.msra.mxu0 0.0
    %1458 = vmatpush.msra.mxu0 0.0
    %1459 = vmatpush.msra.mxu0 0.0
    %1460 = vmatpush.msra.mxu0 0.0
    %1461 = vmatpush.msra.mxu0 0.0
    %1462 = vmatpush.msra.mxu0 %v1053
    %1463 = vmatmul.f32.gmra.mxu0 %v116
    %v1464 = vpop.f32.mrf.mxu0
    %v1465 = vadd.f32 %v38, %v1464
    %1466 = vdwg.mxu0
    %1467 = vmatpush.msra.mxu0 0.0
    %1468 = vmatpush.msra.mxu0 0.0
    %1469 = vmatpush.msra.mxu0 0.0
    %1470 = vmatpush.msra.mxu0 0.0
    %1471 = vmatpush.msra.mxu0 0.0
    %1472 = vmatpush.msra.mxu0 0.0
    %1473 = vmatpush.msra.mxu0 0.0
    %1474 = vmatpush.msra.mxu0 0.0
    %1475 = vmatpush.msra.mxu0 0.0
    %1476 = vmatpush.msra.mxu0 0.0
    %1477 = vmatpush.msra.mxu0 0.0
    %1478 = vmatpush.msra.mxu0 0.0
    %1479 = vmatpush.msra.mxu0 0.0
    %1480 = vmatpush.msra.mxu0 0.0
    %1481 = vmatpush.msra.mxu0 0.0
    %1482 = vmatpush.msra.mxu0 %v1055
    %1483 = vmatmul.f32.gmra.mxu0 %v116
    %v1484 = vpop.f32.mrf.mxu0
    %v1485 = vadd.f32 %v38, %v1484
    %1486 = vdwg.mxu0
    %1487 = vmatpush.msra.mxu0 0.0
    %1488 = vmatpush.msra.mxu0 0.0
    %1489 = vmatpush.msra.mxu0 0.0
    %1490 = vmatpush.msra.mxu0 0.0
    %1491 = vmatpush.msra.mxu0 0.0
    %1492 = vmatpush.msra.mxu0 0.0
    %1493 = vmatpush.msra.mxu0 0.0
    %1494 = vmatpush.msra.mxu0 0.0
    %1495 = vmatpush.msra.mxu0 0.0
    %1496 = vmatpush.msra.mxu0 0.0
    %1497 = vmatpush.msra.mxu0 0.0
    %1498 = vmatpush.msra.mxu0 0.0
    %1499 = vmatpush.msra.mxu0 0.0
    %1500 = vmatpush.msra.mxu0 0.0
    %1501 = vmatpush.msra.mxu0 0.0
    %1502 = vmatpush.msra.mxu0 %v1057
    %1503 = vmatmul.f32.gmra.mxu0 %v116
    %v1504 = vpop.f32.mrf.mxu0
    %v1505 = vadd.f32 %v38, %v1504
    %1506 = vdwg.mxu0
    %1507 = vmatpush.msra.mxu0 0.0
    %1508 = vmatpush.msra.mxu0 0.0
    %1509 = vmatpush.msra.mxu0 0.0
    %1510 = vmatpush.msra.mxu0 0.0
    %1511 = vmatpush.msra.mxu0 0.0
    %1512 = vmatpush.msra.mxu0 0.0
    %1513 = vmatpush.msra.mxu0 0.0
    %1514 = vmatpush.msra.mxu0 0.0
    %1515 = vmatpush.msra.mxu0 0.0
    %1516 = vmatpush.msra.mxu0 0.0
    %1517 = vmatpush.msra.mxu0 0.0
    %1518 = vmatpush.msra.mxu0 0.0
    %1519 = vmatpush.msra.mxu0 0.0
    %1520 = vmatpush.msra.mxu0 0.0
    %1521 = vmatpush.msra.mxu0 0.0
    %1522 = vmatpush.msra.mxu0 %v1059
    %1523 = vmatmul.f32.gmra.mxu0 %v116
    %v1524 = vpop.f32.mrf.mxu0
    %v1525 = vadd.f32 %v38, %v1524
    %1526 = vdwg.mxu0
    %1527 = vmatpush.msra.mxu0 0.0
    %1528 = vmatpush.msra.mxu0 0.0
    %1529 = vmatpush.msra.mxu0 0.0
    %1530 = vmatpush.msra.mxu0 0.0
    %1531 = vmatpush.msra.mxu0 0.0
    %1532 = vmatpush.msra.mxu0 0.0
    %1533 = vmatpush.msra.mxu0 0.0
    %1534 = vmatpush.msra.mxu0 0.0
    %1535 = vmatpush.msra.mxu0 0.0
    %1536 = vmatpush.msra.mxu0 0.0
    %1537 = vmatpush.msra.mxu0 0.0
    %1538 = vmatpush.msra.mxu0 0.0
    %1539 = vmatpush.msra.mxu0 0.0
    %1540 = vmatpush.msra.mxu0 0.0
    %1541 = vmatpush.msra.mxu0 0.0
    %1542 = vmatpush.msra.mxu0 %v1061
    %1543 = vmatmul.f32.gmra.mxu0 %v116
    %v1544 = vpop.f32.mrf.mxu0
    %v1545 = vadd.f32 %v38, %v1544
    %1546 = vdwg.mxu0
    %1547 = vmatpush.msra.mxu0 0.0
    %1548 = vmatpush.msra.mxu0 0.0
    %1549 = vmatpush.msra.mxu0 0.0
    %1550 = vmatpush.msra.mxu0 0.0
    %1551 = vmatpush.msra.mxu0 0.0
    %1552 = vmatpush.msra.mxu0 0.0
    %1553 = vmatpush.msra.mxu0 0.0
    %1554 = vmatpush.msra.mxu0 0.0
    %1555 = vmatpush.msra.mxu0 0.0
    %1556 = vmatpush.msra.mxu0 0.0
    %1557 = vmatpush.msra.mxu0 0.0
    %1558 = vmatpush.msra.mxu0 0.0
    %1559 = vmatpush.msra.mxu0 0.0
    %1560 = vmatpush.msra.mxu0 0.0
    %1561 = vmatpush.msra.mxu0 0.0
    %1562 = vmatpush.msra.mxu0 %v1063
    %1563 = vmatmul.f32.gmra.mxu0 %v116
    %v1564 = vpop.f32.mrf.mxu0
    %v1565 = vadd.f32 %v38, %v1564
    %1566 = vdwg.mxu0
    %1567 = vmatpush.msra.mxu0 0.0
    %1568 = vmatpush.msra.mxu0 0.0
    %1569 = vmatpush.msra.mxu0 0.0
    %1570 = vmatpush.msra.mxu0 0.0
    %1571 = vmatpush.msra.mxu0 0.0
    %1572 = vmatpush.msra.mxu0 0.0
    %1573 = vmatpush.msra.mxu0 0.0
    %1574 = vmatpush.msra.mxu0 0.0
    %1575 = vmatpush.msra.mxu0 0.0
    %1576 = vmatpush.msra.mxu0 0.0
    %1577 = vmatpush.msra.mxu0 0.0
    %1578 = vmatpush.msra.mxu0 0.0
    %1579 = vmatpush.msra.mxu0 0.0
    %1580 = vmatpush.msra.mxu0 0.0
    %1581 = vmatpush.msra.mxu0 0.0
    %1582 = vmatpush.msra.mxu0 %v1065
    %1583 = vmatmul.f32.gmra.mxu0 %v116
    %v1584 = vpop.f32.mrf.mxu0
    %v1585 = vadd.f32 %v38, %v1584
    %1586 = vdwg.mxu0
    %1587 = vmatpush.msra.mxu0 0.0
    %1588 = vmatpush.msra.mxu0 0.0
    %1589 = vmatpush.msra.mxu0 0.0
    %1590 = vmatpush.msra.mxu0 0.0
    %1591 = vmatpush.msra.mxu0 0.0
    %1592 = vmatpush.msra.mxu0 0.0
    %1593 = vmatpush.msra.mxu0 0.0
    %1594 = vmatpush.msra.mxu0 0.0
    %1595 = vmatpush.msra.mxu0 0.0
    %1596 = vmatpush.msra.mxu0 0.0
    %1597 = vmatpush.msra.mxu0 0.0
    %1598 = vmatpush.msra.mxu0 0.0
    %1599 = vmatpush.msra.mxu0 0.0
    %1600 = vmatpush.msra.mxu0 0.0
    %1601 = vmatpush.msra.mxu0 0.0
    %1602 = vmatpush.msra.mxu0 %v1067
    %1603 = vmatmul.f32.gmra.mxu0 %v116
    %v1604 = vpop.f32.mrf.mxu0
    %v1605 = vadd.f32 %v38, %v1604
    %1606 = vdwg.mxu0
    %1607 = vmatpush.msra.mxu0 0.0
    %1608 = vmatpush.msra.mxu0 0.0
    %1609 = vmatpush.msra.mxu0 0.0
    %1610 = vmatpush.msra.mxu0 0.0
    %1611 = vmatpush.msra.mxu0 0.0
    %1612 = vmatpush.msra.mxu0 0.0
    %1613 = vmatpush.msra.mxu0 0.0
    %1614 = vmatpush.msra.mxu0 0.0
    %1615 = vmatpush.msra.mxu0 0.0
    %1616 = vmatpush.msra.mxu0 0.0
    %1617 = vmatpush.msra.mxu0 0.0
    %1618 = vmatpush.msra.mxu0 0.0
    %1619 = vmatpush.msra.mxu0 0.0
    %1620 = vmatpush.msra.mxu0 0.0
    %1621 = vmatpush.msra.mxu0 0.0
    %1622 = vmatpush.msra.mxu0 %v1069
    %1623 = vmatmul.f32.gmra.mxu0 %v116
    %v1624 = vpop.f32.mrf.mxu0
    %v1625 = vadd.f32 %v38, %v1624
    %1626 = vdwg.mxu0
    %1627 = vmatpush.msra.mxu0 0.0
    %1628 = vmatpush.msra.mxu0 0.0
    %1629 = vmatpush.msra.mxu0 0.0
    %1630 = vmatpush.msra.mxu0 0.0
    %1631 = vmatpush.msra.mxu0 0.0
    %1632 = vmatpush.msra.mxu0 0.0
    %1633 = vmatpush.msra.mxu0 0.0
    %1634 = vmatpush.msra.mxu0 0.0
    %1635 = vmatpush.msra.mxu0 0.0
    %1636 = vmatpush.msra.mxu0 0.0
    %1637 = vmatpush.msra.mxu0 0.0
    %1638 = vmatpush.msra.mxu0 0.0
    %1639 = vmatpush.msra.mxu0 0.0
    %1640 = vmatpush.msra.mxu0 0.0
    %1641 = vmatpush.msra.mxu0 0.0
    %1642 = vmatpush.msra.mxu0 %v1071
    %1643 = vmatmul.f32.gmra.mxu0 %v116
    %v1644 = vpop.f32.mrf.mxu0
    %v1645 = vadd.f32 %v38, %v1644
    %1646 = vdwg.mxu0
    %1647 = vmatpush.msra.mxu0 0.0
    %1648 = vmatpush.msra.mxu0 0.0
    %1649 = vmatpush.msra.mxu0 0.0
    %1650 = vmatpush.msra.mxu0 0.0
    %1651 = vmatpush.msra.mxu0 0.0
    %1652 = vmatpush.msra.mxu0 0.0
    %1653 = vmatpush.msra.mxu0 0.0
    %1654 = vmatpush.msra.mxu0 0.0
    %1655 = vmatpush.msra.mxu0 0.0
    %1656 = vmatpush.msra.mxu0 0.0
    %1657 = vmatpush.msra.mxu0 0.0
    %1658 = vmatpush.msra.mxu0 0.0
    %1659 = vmatpush.msra.mxu0 0.0
    %1660 = vmatpush.msra.mxu0 0.0
    %1661 = vmatpush.msra.mxu0 0.0
    %1662 = vmatpush.msra.mxu0 %v1073
    %1663 = vmatmul.f32.gmra.mxu0 %v116
    %v1664 = vpop.f32.mrf.mxu0
    %v1665 = vadd.f32 %v38, %v1664
    %1666 = vdwg.mxu0
    %1667 = vmatpush.msra.mxu0 0.0
    %1668 = vmatpush.msra.mxu0 0.0
    %1669 = vmatpush.msra.mxu0 0.0
    %1670 = vmatpush.msra.mxu0 0.0
    %1671 = vmatpush.msra.mxu0 0.0
    %1672 = vmatpush.msra.mxu0 0.0
    %1673 = vmatpush.msra.mxu0 0.0
    %1674 = vmatpush.msra.mxu0 0.0
    %1675 = vmatpush.msra.mxu0 0.0
    %1676 = vmatpush.msra.mxu0 0.0
    %1677 = vmatpush.msra.mxu0 0.0
    %1678 = vmatpush.msra.mxu0 0.0
    %1679 = vmatpush.msra.mxu0 0.0
    %1680 = vmatpush.msra.mxu0 0.0
    %1681 = vmatpush.msra.mxu0 0.0
    %1682 = vmatpush.msra.mxu0 %v1075
    %1683 = vmatmul.f32.gmra.mxu0 %v116
    %v1684 = vpop.f32.mrf.mxu0
    %v1685 = vadd.f32 %v38, %v1684
    %1686 = vdwg.mxu0
    %1687 = vmatpush.msra.mxu0 0.0
    %1688 = vmatpush.msra.mxu0 0.0
    %1689 = vmatpush.msra.mxu0 0.0
    %1690 = vmatpush.msra.mxu0 0.0
    %1691 = vmatpush.msra.mxu0 0.0
    %1692 = vmatpush.msra.mxu0 0.0
    %1693 = vmatpush.msra.mxu0 0.0
    %1694 = vmatpush.msra.mxu0 0.0
    %1695 = vmatpush.msra.mxu0 0.0
    %1696 = vmatpush.msra.mxu0 0.0
    %1697 = vmatpush.msra.mxu0 0.0
    %1698 = vmatpush.msra.mxu0 0.0
    %1699 = vmatpush.msra.mxu0 0.0
    %1700 = vmatpush.msra.mxu0 0.0
    %1701 = vmatpush.msra.mxu0 0.0
    %1702 = vmatpush.msra.mxu0 %v1077
    %1703 = vmatmul.f32.gmra.mxu0 %v116
    %v1704 = vpop.f32.mrf.mxu0
    %v1705 = vadd.f32 %v38, %v1704
    %1706 = vdwg.mxu0
    %1707 = vmatpush.msra.mxu0 0.0
    %1708 = vmatpush.msra.mxu0 0.0
    %1709 = vmatpush.msra.mxu0 0.0
    %1710 = vmatpush.msra.mxu0 0.0
    %1711 = vmatpush.msra.mxu0 0.0
    %1712 = vmatpush.msra.mxu0 0.0
    %1713 = vmatpush.msra.mxu0 0.0
    %1714 = vmatpush.msra.mxu0 0.0
    %1715 = vmatpush.msra.mxu0 0.0
    %1716 = vmatpush.msra.mxu0 0.0
    %1717 = vmatpush.msra.mxu0 0.0
    %1718 = vmatpush.msra.mxu0 0.0
    %1719 = vmatpush.msra.mxu0 0.0
    %1720 = vmatpush.msra.mxu0 0.0
    %1721 = vmatpush.msra.mxu0 0.0
    %1722 = vmatpush.msra.mxu0 %v1079
    %1723 = vmatmul.f32.gmra.mxu0 %v116
    %v1724 = vpop.f32.mrf.mxu0
    %v1725 = vadd.f32 %v38, %v1724
    %1726 = vdwg.mxu0
    %1727 = vmatpush.msra.mxu0 0.0
    %1728 = vmatpush.msra.mxu0 0.0
    %1729 = vmatpush.msra.mxu0 0.0
    %1730 = vmatpush.msra.mxu0 0.0
    %1731 = vmatpush.msra.mxu0 0.0
    %1732 = vmatpush.msra.mxu0 0.0
    %1733 = vmatpush.msra.mxu0 0.0
    %1734 = vmatpush.msra.mxu0 0.0
    %1735 = vmatpush.msra.mxu0 0.0
    %1736 = vmatpush.msra.mxu0 0.0
    %1737 = vmatpush.msra.mxu0 0.0
    %1738 = vmatpush.msra.mxu0 0.0
    %1739 = vmatpush.msra.mxu0 0.0
    %1740 = vmatpush.msra.mxu0 0.0
    %1741 = vmatpush.msra.mxu0 0.0
    %1742 = vmatpush.msra.mxu0 %v1081
    %1743 = vmatmul.f32.gmra.mxu0 %v116
    %v1744 = vpop.f32.mrf.mxu0
    %v1745 = vadd.f32 %v38, %v1744
    %1746 = vdwg.mxu0
    %1747 = vmatpush.msra.mxu0 0.0
    %1748 = vmatpush.msra.mxu0 0.0
    %1749 = vmatpush.msra.mxu0 0.0
    %1750 = vmatpush.msra.mxu0 0.0
    %1751 = vmatpush.msra.mxu0 0.0
    %1752 = vmatpush.msra.mxu0 0.0
    %1753 = vmatpush.msra.mxu0 0.0
    %1754 = vmatpush.msra.mxu0 0.0
    %1755 = vmatpush.msra.mxu0 0.0
    %1756 = vmatpush.msra.mxu0 0.0
    %1757 = vmatpush.msra.mxu0 0.0
    %1758 = vmatpush.msra.mxu0 0.0
    %1759 = vmatpush.msra.mxu0 0.0
    %1760 = vmatpush.msra.mxu0 0.0
    %1761 = vmatpush.msra.mxu0 0.0
    %1762 = vmatpush.msra.mxu0 %v1083
    %1763 = vmatmul.f32.gmra.mxu0 %v116
    %v1764 = vpop.f32.mrf.mxu0
    %v1765 = vadd.f32 %v38, %v1764
    %1766 = vdwg.mxu0
    %1767 = vmatpush.msra.mxu0 0.0
    %1768 = vmatpush.msra.mxu0 0.0
    %1769 = vmatpush.msra.mxu0 0.0
    %1770 = vmatpush.msra.mxu0 0.0
    %1771 = vmatpush.msra.mxu0 0.0
    %1772 = vmatpush.msra.mxu0 0.0
    %1773 = vmatpush.msra.mxu0 0.0
    %1774 = vmatpush.msra.mxu0 0.0
    %1775 = vmatpush.msra.mxu0 0.0
    %1776 = vmatpush.msra.mxu0 0.0
    %1777 = vmatpush.msra.mxu0 0.0
    %1778 = vmatpush.msra.mxu0 0.0
    %1779 = vmatpush.msra.mxu0 0.0
    %1780 = vmatpush.msra.mxu0 0.0
    %1781 = vmatpush.msra.mxu0 0.0
    %1782 = vmatpush.msra.mxu0 %v1085
    %1783 = vmatmul.f32.gmra.mxu0 %v116
    %v1784 = vpop.f32.mrf.mxu0
    %v1785 = vadd.f32 %v38, %v1784
    %1786 = vdwg.mxu0
    %s1787 = scalar_lea.vmem [#allocation2], 280
    %1788 = vst [vmem:[%s1787] sm:$0xff] %v1105
    %1789 = vst [vmem:[%s1787 + $0x8] sm:$0xff] %v1125
    %1790 = vst [vmem:[%s1787 + $0x10] sm:$0xff] %v1145
    %1791 = vst [vmem:[%s1787 + $0x18] sm:$0xff] %v1165
    %1792 = vst [vmem:[%s1787 + $0x20] sm:$0xff] %v1185
    %1793 = vst [vmem:[%s1787 + $0x28] sm:$0xff] %v1205
    %1794 = vst [vmem:[%s1787 + $0x30] sm:$0xff] %v1225
    %1795 = vst [vmem:[%s1787 + $0x38] sm:$0xff] %v1245
    %1796 = vst [vmem:[%s1787 + $0x40] sm:$0xff] %v1265
    %1797 = vst [vmem:[%s1787 + $0x48] sm:$0xff] %v1285
    %1798 = vst [vmem:[%s1787 + $0x50] sm:$0xff] %v1305
    %1799 = vst [vmem:[%s1787 + $0x58] sm:$0xff] %v1325
    %1800 = vst [vmem:[%s1787 + $0x60] sm:$0xff] %v1345
    %1801 = vst [vmem:[%s1787 + $0x68] sm:$0xff] %v1365
    %1802 = vst [vmem:[%s1787 + $0x70] sm:$0xff] %v1385
    %1803 = vst [vmem:[%s1787 + $0x78] sm:$0xff] %v1405
    %1804 = vst [vmem:[%s1787 + $0x80] sm:$0xff] %v1425
    %1805 = vst [vmem:[%s1787 + $0x88] sm:$0xff] %v1445
    %1806 = vst [vmem:[%s1787 + $0x90] sm:$0xff] %v1465
    %1807 = vst [vmem:[%s1787 + $0x98] sm:$0xff] %v1485
    %1808 = vst [vmem:[%s1787 + $0xa0] sm:$0xff] %v1505
    %1809 = vst [vmem:[%s1787 + $0xa8] sm:$0xff] %v1525
    %1810 = vst [vmem:[%s1787 + $0xb0] sm:$0xff] %v1545
    %1811 = vst [vmem:[%s1787 + $0xb8] sm:$0xff] %v1565
    %1812 = vst [vmem:[%s1787 + $0xc0] sm:$0xff] %v1585
    %1813 = vst [vmem:[%s1787 + $0xc8] sm:$0xff] %v1605
    %1814 = vst [vmem:[%s1787 + $0xd0] sm:$0xff] %v1625
    %1815 = vst [vmem:[%s1787 + $0xd8] sm:$0xff] %v1645
    %1816 = vst [vmem:[%s1787 + $0xe0] sm:$0xff] %v1665
    %1817 = vst [vmem:[%s1787 + $0xe8] sm:$0xff] %v1685
    %1818 = vst [vmem:[%s1787 + $0xf0] sm:$0xff] %v1705
    %1819 = vst [vmem:[%s1787 + $0xf8] sm:$0xff] %v1725
    %1820 = vst [vmem:[%s1787 + $0x100] sm:$0xff] %v1745
    %1821 = vst [vmem:[%s1787 + $0x108] sm:$0xff] %v1765
    %1822 = vst [vmem:[%s1787 + $0x110] sm:$0xff] %v1785
    // Predicated region
    $region14: #{tpu_custom_call.1} parent=1 // pred_check
      _
    $region15: #{tpu_custom_call.1} parent=1 // pred_check_branch
      %1824 = sbr.rel (0) target = $region17
    $region16: #{tpu_custom_call.1} parent=1 // pred_region
      %1826 = vsyncadd [#allocation3], 0
      %s1827 = sshll.u32 [#allocation2], 4
      %s1828 = int_to_ptr.vmem [resolvable:$true] %s1827
      %s1829 = sshll.u32 %s3, 4
      %s1830 = int_to_ptr.hbm [resolvable:$true] %s1829
      %1835 = dma.vmem_to_hbm [thread:$0]  %s1828, 8960, %s1830, [#allocation3], 4480, 4480, 280
    $region17: #{tpu_custom_call.1} parent=1 // pred_fallthru
      _
    // Predicated region
    $region18: #{tpu_custom_call.1} parent=1 // pred_check
      _
    $region19: #{tpu_custom_call.1} parent=1 // pred_check_branch
      %1837 = sbr.rel (0) target = $region21
    $region20: #{tpu_custom_call.1} parent=1 // pred_region
      %1839 = dma.done [#allocation3], 8960
    $region21: #{tpu_custom_call.1} parent=1 // pred_fallthru
      _
    %1840 = vsyncpa [#allocation3], 1

</llo_original>
